<compile_context>
chip_gen: v7x
topology: tpu7x:2x2x1
jax: 0.10.0
libtpu: 0.0.40
codegen_flags: <defaults>
</compile_context>

<pallas_src>
import functools

import jax
import jax.numpy as jnp
from jax.experimental import pallas as pl
from jax.experimental.pallas import tpu as pltpu


def _silu_to_bf16(v, act_dtype):
    """SiLU via tanh (one EUP op/element): silu(v) = 0.5*v*(1+tanh(v/2)).

    Computed in `act_dtype` (bf16 on v6e/v7x, f32 on v5e) and returned as a
    bf16 MXU operand, so no separate full-tile f32->bf16 cast is needed.
    """
    v = v.astype(act_dtype)
    return (0.5 * v * (1.0 + jnp.tanh(0.5 * v))).astype(jnp.bfloat16)


# ----------------------------------------------------------------------------
# Kernel: per-voxel UNet body in (C, P) channel-major layout
#   conv_in (1x1x1) -> ResBlock(SiLU, conv, +temb, SiLU, conv, skip) -> conv_out
#   All "convs" are pointwise channel matmuls:  W(out_ch, in_ch) @ X(in_ch, TP)
# ----------------------------------------------------------------------------
def unet_body_kernel(x_ref, temb_ref,
                     win_ref, bin_ref,
                     w1_ref,
                     w2_ref, b2_ref,
                     wout_ref, bout_ref,
                     o_ref, *, act_dtype):
    x = x_ref[0]                  # (Cin, TP)    bf16
    temb_b1 = temb_ref[0]         # (hidden, 1)  f32, already includes b_r1

    # conv_in  (bf16 MXU operands, f32 accumulation)
    h = jnp.dot(win_ref[...], x, preferred_element_type=jnp.float32) + bin_ref[...]

    # residual block with timestep-embedding injection
    r = jnp.dot(w1_ref[...], _silu_to_bf16(h, act_dtype),
                preferred_element_type=jnp.float32) + temb_b1
    r = jnp.dot(w2_ref[...], _silu_to_bf16(r, act_dtype),
                preferred_element_type=jnp.float32) + b2_ref[...]
    h = h + r                      # skip-add kept in f32

    # conv_out -> (Cout, TP): lane-dense output tile
    out = jnp.dot(wout_ref[...], _silu_to_bf16(h, act_dtype),
                  preferred_element_type=jnp.float32) + bout_ref[...]
    o_ref[0] = out.astype(o_ref.dtype)


# ----------------------------------------------------------------------------
# Hardware-aware tiling helpers
# ----------------------------------------------------------------------------
def _vmem_capacity_bytes():
    try:
        return int(pltpu.get_tpu_info().vmem_capacity_bytes)
    except Exception:
        kind = jax.devices()[0].device_kind.lower()
        return (64 << 20) if "v7" in kind else (128 << 20)


def _act_dtype():
    # bf16 SiLU only on generations with bf16 VPU/EUP (v6e, v7x); f32 on v5e.
    kind = jax.devices()[0].device_kind.lower()
    return jnp.bfloat16 if ("v6" in kind or "v7" in kind) else jnp.float32


def _pick_tile_p(p, n, vmem_cap):
    # Big tiles amortize the ~0.35 us/step pipeline overhead.  Cap by VMEM:
    # 4096 lanes on 64 MiB parts (v7x), 8192 on 128 MiB parts (v5e/v6e).
    cap = 4096 if vmem_cap <= (64 << 20) else 8192
    divs = [d for d in range(128, p + 1, 128) if p % d == 0]
    candidates = sorted(set(divs + [p]))              # tile == p is always legal
    fitting = [d for d in candidates if d <= cap]
    tile = max(fitting) if fitting else min(candidates)
    # Megacore (v7x has 2 TCs): keep >= 2 grid steps when the batch axis can't.
    if n == 1 and tile == p:
        halves = [d for d in divs if d <= p // 2]
        if halves:
            tile = max(halves)
    return tile


def unet_body(x_cp, temb_b1, params):
    # x_cp: (N, Cin, P) bf16   temb_b1: (N, hidden, 1) f32 (temb + b_r1 folded)
    n, c_in, p = x_cp.shape
    hidden = temb_b1.shape[1]
    c_out = params["w_out"].shape[0]

    vmem_cap = _vmem_capacity_bytes()
    tile_p = _pick_tile_p(p, n, vmem_cap)
    grid = (n, pl.cdiv(p, tile_p))

    # VMEM budget: double-buffered I/O tiles + compiler-internal (hidden, TP)
    # temporaries, with headroom; clamped below physical capacity.
    io_bytes = 2 * (c_in * tile_p * 2 + c_out * tile_p * 4)
    tmp_bytes = 6 * hidden * tile_p * 4
    vmem_limit = max(32 << 20,
                     min(int(0.85 * vmem_cap), io_bytes + tmp_bytes + (16 << 20)))

    # (Weights/biases are grid-constant; a Buffered(1) pipeline_mode would shave
    #  ~100 KiB of VMEM but is marginal, so left at defaults.)
    const = lambda shape: pl.BlockSpec(shape, lambda b, i: (0,) * len(shape))

    kernel = functools.partial(unet_body_kernel, act_dtype=_act_dtype())

    return pl.pallas_call(
        kernel,
        out_shape=jax.ShapeDtypeStruct((n, c_out, p), jnp.float32),
        grid=grid,
        in_specs=[
            pl.BlockSpec((1, c_in, tile_p), lambda b, i: (b, 0, i)),   # x
            pl.BlockSpec((1, hidden, 1), lambda b, i: (b, 0, 0)),      # temb+b_r1
            const(params["w_in"].shape), const(params["b_in"].shape),
            const(params["w_r1"].shape),
            const(params["w_r2"].shape), const(params["b_r2"].shape),
            const(params["w_out"].shape), const(params["b_out"].shape),
        ],
        out_specs=pl.BlockSpec((1, c_out, tile_p), lambda b, i: (b, 0, i)),
        compiler_params=pltpu.CompilerParams(
            dimension_semantics=("parallel", "parallel"),
            vmem_limit_bytes=vmem_limit),
    )(x_cp, temb_b1,
      params["w_in"], params["b_in"],
      params["w_r1"],
      params["w_r2"], params["b_r2"],
      params["w_out"], params["b_out"])


# ----------------------------------------------------------------------------
# Glue: sinusoidal timestep embedding + params + layout plumbing (reshape only)
# ----------------------------------------------------------------------------
def sinusoidal_embedding(timesteps, dim, max_period=10000.0):
    half = dim // 2
    freqs = jnp.exp(
        -jnp.log(max_period) * jnp.arange(half, dtype=jnp.float32) / half)
    args = timesteps.astype(jnp.float32)[:, None] * freqs[None, :]
    return jnp.concatenate([jnp.cos(args), jnp.sin(args)], axis=-1)


def init_params(key, c_in=4, c_out=4, t_dim=32, hidden=128, scale=0.05):
    ks = jax.random.split(key, 6)
    f32 = jnp.float32
    bf16 = jnp.bfloat16
    return {
        # timestep-embedding MLP (~16 KFLOP total -> plain XLA in the wrapper)
        "t_w1": scale * jax.random.normal(ks[0], (t_dim, hidden), f32),
        "t_b1": jnp.zeros((hidden,), f32),
        "t_w2": scale * jax.random.normal(ks[1], (hidden, hidden), f32),
        "t_b2": jnp.zeros((hidden,), f32),
        # UNet body weights stored transposed (out_ch, in_ch) and in bf16 so the
        # in-kernel matmuls are weights-on-the-left with bf16 MXU operands.
        "w_in": (scale * jax.random.normal(ks[2], (hidden, c_in), f32)).astype(bf16),
        "b_in": jnp.zeros((hidden, 1), f32),
        "w_r1": (scale * jax.random.normal(ks[3], (hidden, hidden), f32)).astype(bf16),
        "b_r1": jnp.zeros((hidden, 1), f32),   # folded into temb in the wrapper
        "w_r2": (scale * jax.random.normal(ks[4], (hidden, hidden), f32)).astype(bf16),
        "b_r2": jnp.zeros((hidden, 1), f32),
        "w_out": (scale * jax.random.normal(ks[5], (c_out, hidden), f32)).astype(bf16),
        "b_out": jnp.zeros((c_out, 1), f32),
    }


@jax.jit
def net_forward(noisy_latents, timesteps, params):
    """Equivalent of Net.forward: model_pred = denoising_unet(x, t).sample."""
    n, c, d, h, w = noisy_latents.shape
    t_dim = params["t_w1"].shape[0]

    # timestep embedding MLP: tiny, runs in plain XLA (no extra kernel launch)
    temb_sin = sinusoidal_embedding(timesteps, t_dim)
    th = jax.nn.silu(temb_sin @ params["t_w1"] + params["t_b1"])
    temb = th @ params["t_w2"] + params["t_b2"]            # (N, hidden)
    # Fold the first residual-conv bias into temb: one broadcast add per step
    # inside the kernel instead of two.
    temb_b1 = temb[:, :, None] + params["b_r1"][None]      # (N, hidden, 1)

    # NCDHW -> (N, C, P) is a pure reshape; cast to bf16 once here (halves the
    # input DMA; the kernel feeds bf16 straight to the MXU anyway).
    x_cp = noisy_latents.reshape(n, c, d * h * w).astype(jnp.bfloat16)

    out_cp = unet_body(x_cp, temb_b1, params)              # (N, Cout, P) f32

    # back to NCDHW (same shape as input, like a denoising UNet's .sample)
    return out_cp.reshape(n, -1, d, h, w)


if __name__ == "__main__":
    key = jax.random.PRNGKey(0)
    k_x, k_p = jax.random.split(key)

    # small shapes consistent with a latent-video denoising UNet input
    N, C, D, H, W = 2, 4, 4, 8, 8          # NCDHW, P = D*H*W = 256
    noisy_latents = jax.random.normal(k_x, (N, C, D, H, W), jnp.float32)
    timesteps = jnp.array([10, 500], dtype=jnp.int32)

    params = init_params(k_p, c_in=C, c_out=C, t_dim=32, hidden=128)

    model_pred = net_forward(noisy_latents, timesteps, params)
    jax.block_until_ready(model_pred)

    assert model_pred.shape == noisy_latents.shape
    assert model_pred.dtype == jnp.float32
    assert bool(jnp.all(jnp.isfinite(model_pred)))
    print("KERNEL_OK")
</pallas_src>

<mosaic_0001>
module attributes {stable_mosaic.version = 11 : i64} {
  func.func @unet_body_kernel(%arg0: i32, %arg1: i32, %arg2: memref<1x4x256xbf16, #tpu.memory_space<vmem>>, %arg3: memref<1x128x1xf32, #tpu.memory_space<vmem>>, %arg4: memref<128x4xbf16, #tpu.memory_space<vmem>>, %arg5: memref<128x1xf32, #tpu.memory_space<vmem>>, %arg6: memref<128x128xbf16, #tpu.memory_space<vmem>>, %arg7: memref<128x128xbf16, #tpu.memory_space<vmem>>, %arg8: memref<128x1xf32, #tpu.memory_space<vmem>>, %arg9: memref<4x128xbf16, #tpu.memory_space<vmem>>, %arg10: memref<4x1xf32, #tpu.memory_space<vmem>>, %arg11: memref<1x4x256xf32, #tpu.memory_space<vmem>>) attributes {dimension_semantics = [#tpu.dimension_semantics<parallel>, #tpu.dimension_semantics<parallel>], iteration_bounds = array<i64: 2, 1>, scalar_prefetch = 0 : i64, scratch_operands = 0 : i64, tpu.core_type = #tpu.core_type<tc>, window_params = [{transform_indices = @transform_0, window_bounds = array<i64: 1, 4, 256>}, {transform_indices = @transform_1, window_bounds = array<i64: 1, 128, 1>}, {pipeline_mode = #tpu.pipeline_mode<synchronous>, transform_indices = @transform_2, window_bounds = array<i64: 128, 4>}, {pipeline_mode = #tpu.pipeline_mode<synchronous>, transform_indices = @transform_3, window_bounds = array<i64: 128, 1>}, {pipeline_mode = #tpu.pipeline_mode<synchronous>, transform_indices = @transform_4, window_bounds = array<i64: 128, 128>}, {pipeline_mode = #tpu.pipeline_mode<synchronous>, transform_indices = @transform_5, window_bounds = array<i64: 128, 128>}, {pipeline_mode = #tpu.pipeline_mode<synchronous>, transform_indices = @transform_6, window_bounds = array<i64: 128, 1>}, {pipeline_mode = #tpu.pipeline_mode<synchronous>, transform_indices = @transform_7, window_bounds = array<i64: 4, 128>}, {pipeline_mode = #tpu.pipeline_mode<synchronous>, transform_indices = @transform_8, window_bounds = array<i64: 4, 1>}, {transform_indices = @transform_9, window_bounds = array<i64: 1, 4, 256>}]} {
    %c0 = arith.constant 0 : index
    %c0_0 = arith.constant 0 : index
    %c0_1 = arith.constant 0 : index
    %0 = vector.load %arg2[%c0, %c0_0, %c0_1] : memref<1x4x256xbf16, #tpu.memory_space<vmem>>, vector<1x4x256xbf16>
    %1 = vector.shape_cast %0 : vector<1x4x256xbf16> to vector<4x256xbf16>
    %c0_2 = arith.constant 0 : index
    %c0_3 = arith.constant 0 : index
    %c0_4 = arith.constant 0 : index
    %2 = vector.load %arg3[%c0_2, %c0_3, %c0_4] : memref<1x128x1xf32, #tpu.memory_space<vmem>>, vector<1x128x1xf32>
    %3 = vector.shape_cast %2 : vector<1x128x1xf32> to vector<128x1xf32>
    %c0_5 = arith.constant 0 : index
    %c0_6 = arith.constant 0 : index
    %4 = vector.load %arg4[%c0_5, %c0_6] : memref<128x4xbf16, #tpu.memory_space<vmem>>, vector<128x4xbf16>
    %cst = arith.constant dense<0.000000e+00> : vector<128x256xf32>
    %5 = tpu.matmul %4, %1, %cst {dimension_numbers = #tpu.dot_dimension_numbers<[1], [0], [0], [1], [0, 0, 1, 1], [], []>} : vector<128x4xbf16>, vector<4x256xbf16>, vector<128x256xf32> -> vector<128x256xf32>
    %c0_7 = arith.constant 0 : index
    %c0_8 = arith.constant 0 : index
    %6 = vector.load %arg5[%c0_7, %c0_8] : memref<128x1xf32, #tpu.memory_space<vmem>>, vector<128x1xf32>
    %7 = vector.broadcast %6 : vector<128x1xf32> to vector<128x256xf32>
    %8 = arith.addf %5, %7 : vector<128x256xf32>
    %c0_9 = arith.constant 0 : index
    %c0_10 = arith.constant 0 : index
    %9 = vector.load %arg6[%c0_9, %c0_10] : memref<128x128xbf16, #tpu.memory_space<vmem>>, vector<128x128xbf16>
    %cst_11 = arith.constant 5.000000e-01 : f32
    %10 = vector.broadcast %cst_11 : f32 to vector<128x256xf32>
    %11 = arith.mulf %10, %8 : vector<128x256xf32>
    %cst_12 = arith.constant 5.000000e-01 : f32
    %12 = vector.broadcast %cst_12 : f32 to vector<128x256xf32>
    %13 = arith.mulf %12, %8 : vector<128x256xf32>
    %14 = math.tanh %13 : vector<128x256xf32>
    %cst_13 = arith.constant 1.000000e+00 : f32
    %15 = vector.broadcast %cst_13 : f32 to vector<128x256xf32>
    %16 = arith.addf %15, %14 : vector<128x256xf32>
    %17 = arith.mulf %11, %16 : vector<128x256xf32>
    %18 = arith.truncf %17 : vector<128x256xf32> to vector<128x256xbf16>
    %cst_14 = arith.constant dense<0.000000e+00> : vector<128x256xf32>
    %19 = tpu.matmul %9, %18, %cst_14 {dimension_numbers = #tpu.dot_dimension_numbers<[1], [0], [0], [1], [0, 0, 1, 1], [], []>} : vector<128x128xbf16>, vector<128x256xbf16>, vector<128x256xf32> -> vector<128x256xf32>
    %20 = vector.broadcast %3 : vector<128x1xf32> to vector<128x256xf32>
    %21 = arith.addf %19, %20 : vector<128x256xf32>
    %c0_15 = arith.constant 0 : index
    %c0_16 = arith.constant 0 : index
    %22 = vector.load %arg7[%c0_15, %c0_16] : memref<128x128xbf16, #tpu.memory_space<vmem>>, vector<128x128xbf16>
    %cst_17 = arith.constant 5.000000e-01 : f32
    %23 = vector.broadcast %cst_17 : f32 to vector<128x256xf32>
    %24 = arith.mulf %23, %21 : vector<128x256xf32>
    %cst_18 = arith.constant 5.000000e-01 : f32
    %25 = vector.broadcast %cst_18 : f32 to vector<128x256xf32>
    %26 = arith.mulf %25, %21 : vector<128x256xf32>
    %27 = math.tanh %26 : vector<128x256xf32>
    %cst_19 = arith.constant 1.000000e+00 : f32
    %28 = vector.broadcast %cst_19 : f32 to vector<128x256xf32>
    %29 = arith.addf %28, %27 : vector<128x256xf32>
    %30 = arith.mulf %24, %29 : vector<128x256xf32>
    %31 = arith.truncf %30 : vector<128x256xf32> to vector<128x256xbf16>
    %cst_20 = arith.constant dense<0.000000e+00> : vector<128x256xf32>
    %32 = tpu.matmul %22, %31, %cst_20 {dimension_numbers = #tpu.dot_dimension_numbers<[1], [0], [0], [1], [0, 0, 1, 1], [], []>} : vector<128x128xbf16>, vector<128x256xbf16>, vector<128x256xf32> -> vector<128x256xf32>
    %c0_21 = arith.constant 0 : index
    %c0_22 = arith.constant 0 : index
    %33 = vector.load %arg8[%c0_21, %c0_22] : memref<128x1xf32, #tpu.memory_space<vmem>>, vector<128x1xf32>
    %34 = vector.broadcast %33 : vector<128x1xf32> to vector<128x256xf32>
    %35 = arith.addf %32, %34 : vector<128x256xf32>
    %36 = arith.addf %8, %35 : vector<128x256xf32>
    %c0_23 = arith.constant 0 : index
    %c0_24 = arith.constant 0 : index
    %37 = vector.load %arg9[%c0_23, %c0_24] : memref<4x128xbf16, #tpu.memory_space<vmem>>, vector<4x128xbf16>
    %cst_25 = arith.constant 5.000000e-01 : f32
    %38 = vector.broadcast %cst_25 : f32 to vector<128x256xf32>
    %39 = arith.mulf %38, %36 : vector<128x256xf32>
    %cst_26 = arith.constant 5.000000e-01 : f32
    %40 = vector.broadcast %cst_26 : f32 to vector<128x256xf32>
    %41 = arith.mulf %40, %36 : vector<128x256xf32>
    %42 = math.tanh %41 : vector<128x256xf32>
    %cst_27 = arith.constant 1.000000e+00 : f32
    %43 = vector.broadcast %cst_27 : f32 to vector<128x256xf32>
    %44 = arith.addf %43, %42 : vector<128x256xf32>
    %45 = arith.mulf %39, %44 : vector<128x256xf32>
    %46 = arith.truncf %45 : vector<128x256xf32> to vector<128x256xbf16>
    %cst_28 = arith.constant dense<0.000000e+00> : vector<4x256xf32>
    %47 = tpu.matmul %37, %46, %cst_28 {dimension_numbers = #tpu.dot_dimension_numbers<[1], [0], [0], [1], [0, 0, 1, 1], [], []>} : vector<4x128xbf16>, vector<128x256xbf16>, vector<4x256xf32> -> vector<4x256xf32>
    %c0_29 = arith.constant 0 : index
    %c0_30 = arith.constant 0 : index
    %48 = vector.load %arg10[%c0_29, %c0_30] : memref<4x1xf32, #tpu.memory_space<vmem>>, vector<4x1xf32>
    %49 = vector.broadcast %48 : vector<4x1xf32> to vector<4x256xf32>
    %50 = arith.addf %47, %49 : vector<4x256xf32>
    %c0_31 = arith.constant 0 : index
    %c0_32 = arith.constant 0 : index
    %c0_33 = arith.constant 0 : index
    %51 = vector.load %arg11[%c0_31, %c0_32, %c0_33] : memref<1x4x256xf32, #tpu.memory_space<vmem>>, vector<1x4x256xf32>
    %52 = vector.shape_cast %51 : vector<1x4x256xf32> to vector<4x256xf32>
    %53 = vector.shape_cast %50 : vector<4x256xf32> to vector<1x4x256xf32>
    tpu.vector_store %arg11[%c0_31, %c0_32, %c0_33], %53 {strides = array<i32>} : memref<1x4x256xf32, #tpu.memory_space<vmem>>, vector<1x4x256xf32>,
    return
  }
  func.func @transform_0(%arg0: i32, %arg1: i32) -> (i32, i32, i32) {
    %c0_i32 = arith.constant 0 : i32
    %c0_i32_0 = arith.constant 0 : i32
    return %arg0, %c0_i32, %arg1 : i32, i32, i32
  }
  func.func @transform_1(%arg0: i32, %arg1: i32) -> (i32, i32, i32) {
    %c0_i32 = arith.constant 0 : i32
    %c0_i32_0 = arith.constant 0 : i32
    %c0_i32_1 = arith.constant 0 : i32
    return %arg0, %c0_i32, %c0_i32_0 : i32, i32, i32
  }
  func.func @transform_2(%arg0: i32, %arg1: i32) -> (i32, i32) {
    %c0_i32 = arith.constant 0 : i32
    %c0_i32_0 = arith.constant 0 : i32
    %c0_i32_1 = arith.constant 0 : i32
    return %c0_i32, %c0_i32_0 : i32, i32
  }
  func.func @transform_3(%arg0: i32, %arg1: i32) -> (i32, i32) {
    %c0_i32 = arith.constant 0 : i32
    %c0_i32_0 = arith.constant 0 : i32
    %c0_i32_1 = arith.constant 0 : i32
    return %c0_i32, %c0_i32_0 : i32, i32
  }
  func.func @transform_4(%arg0: i32, %arg1: i32) -> (i32, i32) {
    %c0_i32 = arith.constant 0 : i32
    %c0_i32_0 = arith.constant 0 : i32
    %c0_i32_1 = arith.constant 0 : i32
    return %c0_i32, %c0_i32_0 : i32, i32
  }
  func.func @transform_5(%arg0: i32, %arg1: i32) -> (i32, i32) {
    %c0_i32 = arith.constant 0 : i32
    %c0_i32_0 = arith.constant 0 : i32
    %c0_i32_1 = arith.constant 0 : i32
    return %c0_i32, %c0_i32_0 : i32, i32
  }
  func.func @transform_6(%arg0: i32, %arg1: i32) -> (i32, i32) {
    %c0_i32 = arith.constant 0 : i32
    %c0_i32_0 = arith.constant 0 : i32
    %c0_i32_1 = arith.constant 0 : i32
    return %c0_i32, %c0_i32_0 : i32, i32
  }
  func.func @transform_7(%arg0: i32, %arg1: i32) -> (i32, i32) {
    %c0_i32 = arith.constant 0 : i32
    %c0_i32_0 = arith.constant 0 : i32
    %c0_i32_1 = arith.constant 0 : i32
    return %c0_i32, %c0_i32_0 : i32, i32
  }
  func.func @transform_8(%arg0: i32, %arg1: i32) -> (i32, i32) {
    %c0_i32 = arith.constant 0 : i32
    %c0_i32_0 = arith.constant 0 : i32
    %c0_i32_1 = arith.constant 0 : i32
    return %c0_i32, %c0_i32_0 : i32, i32
  }
  func.func @transform_9(%arg0: i32, %arg1: i32) -> (i32, i32, i32) {
    %c0_i32 = arith.constant 0 : i32
    %c0_i32_0 = arith.constant 0 : i32
    return %arg0, %c0_i32, %arg1 : i32, i32, i32
  }
}

</mosaic_0001>

<llo_original>
// kernel: net_forward.1
$region0: #{net_forward.1}
  #allocation0 [shape = 'u32[]', space=smem, size = 0x4, offset = 0x4, fixed_abs, tag = 'smem constant byte address 0x4 - core index']
  #allocation1 [shape = 'u32[144,128]{1,0:T(1,128)}', space=vmem, size = 0x12000, scoped, tag = 'internal scratch']
  %s0 = inlined_call_operand.vmem [shape: bf16[2,4,256], index: 0, kind: input, shape index: {}]
  %s1 = inlined_call_operand.vmem [shape: f32[2,128,1], index: 1, kind: input, shape index: {}]
  %s2 = inlined_call_operand.vmem [shape: bf16[128,4], index: 2, kind: input, shape index: {}]
  %s3 = inlined_call_operand.vmem [shape: f32[128,1], index: 3, kind: input, shape index: {}]
  %s4 = inlined_call_operand.vmem [shape: bf16[128,128], index: 4, kind: input, shape index: {}]
  %s5 = inlined_call_operand.vmem [shape: bf16[128,128], index: 5, kind: input, shape index: {}]
  %s6 = inlined_call_operand.vmem [shape: f32[128,1], index: 6, kind: input, shape index: {}]
  %s7 = inlined_call_operand.vmem [shape: bf16[4,128], index: 7, kind: input, shape index: {}]
  %s8 = inlined_call_operand.vmem [shape: f32[4,1], index: 8, kind: input, shape index: {}]
  %s9 = inlined_call_operand.vmem [shape: f32[2,4,256], index: 9, kind: output, shape index: {}]
  %s10 = sld [smem:[#allocation0]]
  $region69: #{net_forward.1} parent=0
    _
  %s12 = ssub.s32 1, %s10
  %s13 = scalar_select 0, %s12, %s10
  loop: start=0, step=1, limit=4
  $region2: #{net_forward.1} parent=0 // loop_pre_header
    _
  $region3: #{net_forward.1} parent=0 // loop_header
    %s15 = sphi 0, %s19
    %p16 = scmp.ge.s32.totalorder %s15, 4
    %s22 = sphi 0, %s34
    %s23 = sphi 0, %s30
    %s24 = sphi 0, %s22
    %s25 = sphi 0, %s23
    %s26 = sphi 0, %s24
    %s27 = sphi 0, %s25
    %s39 = sphi 0, %s41
    %s42 = sphi 0, %s39
    %s43 = sphi 0, %s42
    %s59 = sphi 0, %s43
    %s65 = sphi 0, %s67
    %s68 = sphi 0, %s65
    %s69 = sphi 0, %s68
    %s85 = sphi 0, %s69
    %s89 = sphi 0, %s89
    %s91 = sphi 0, %s89
    %s92 = sphi 0, %s91
    %s106 = sphi 0, %s92
    %s110 = sphi 0, %s110
    %s112 = sphi 0, %s110
    %s113 = sphi 0, %s112
    %s127 = sphi 0, %s113
    %s131 = sphi 0, %s131
    %s133 = sphi 0, %s131
    %s134 = sphi 0, %s133
    %s148 = sphi 0, %s134
    %s152 = sphi 0, %s152
    %s154 = sphi 0, %s152
    %s155 = sphi 0, %s154
    %s169 = sphi 0, %s155
    %s173 = sphi 0, %s173
    %s175 = sphi 0, %s173
    %s176 = sphi 0, %s175
    %s190 = sphi 0, %s176
    %s194 = sphi 0, %s194
    %s196 = sphi 0, %s194
    %s197 = sphi 0, %s196
    %s211 = sphi 0, %s197
    %s215 = sphi 0, %s215
    %s217 = sphi 0, %s215
    %s218 = sphi 0, %s217
    %s232 = sphi 0, %s218
    %s240 = sphi 0, %s242
    %s243 = sphi 0, %s240
    %s244 = sphi 0, %s243
    %s260 = sphi 0, %s244
  $region4: #{net_forward.1} parent=0 // loop_header_branch
    %18 = sbr.rel (%p16) target = $region8
  $region5: #{net_forward.1} parent=0 // loop_body
    %s20 = ssub.s32 %s15, 1
    %s21 = ssub.s32 %s15, 2
    %s28 = sadd.s32 1, %s23
    %p29 = scmp.ge.s32.totalorder %s28, 1
    %s30 = scalar_select %p29, 0, %s28
    %s31 = sadd.s32 1, %s22
    %s32 = scalar_select %p29, %s31, %s22
    %p33 = scmp.ge.s32.totalorder %s32, 2
    %s34 = scalar_select %p33, 0, %s32
    %s35 = ssub.s32 %s22, %s34
    %s36 = ssub.s32 %s23, %s30
    %s37 = sor.u32 %s35, %s36
    %p38 = scmp.eq.s32.totalorder %s37, 0
    %s40 = sadd.s32 %s39, 1
    %s41 = scalar_select %p38, %s39, %s40
    %p44 = pneg %p38
    %p45 = scmp.eq.s32.totalorder %s15, 1
    %p46 = por %p44, %p45
    %p47 = scmp.ne.s32.totalorder %s39, %s42
    %p48 = scmp.eq.s32.totalorder %s15, 0
    %p49 = por %p47, %p48
    %p50 = scmp.ne.s32.totalorder %s39, %s42
    %p51 = scmp.eq.s32.totalorder %s20, 1
    %p52 = por %p50, %p51
    %p53 = scmp.ne.s32.totalorder %s42, %s43
    %p54 = scmp.eq.s32.totalorder %s20, 0
    %p55 = por %p53, %p54
    %p56 = scmp.ne.s32.totalorder %s42, %s43
    %p57 = scmp.eq.s32.totalorder %s21, 1
    %p58 = por %p56, %p57
    %p60 = scmp.ne.s32.totalorder %s43, %s59
    %p61 = scmp.eq.s32.totalorder %s21, 0
    %p62 = por %p60, %p61
    %s63 = ssub.s32 %s22, %s34
    %p64 = scmp.eq.s32.totalorder %s63, 0
    %s66 = sadd.s32 %s65, 1
    %s67 = scalar_select %p64, %s65, %s66
    %p70 = pneg %p64
    %p71 = scmp.eq.s32.totalorder %s15, 1
    %p72 = por %p70, %p71
    %p73 = scmp.ne.s32.totalorder %s65, %s68
    %p74 = scmp.eq.s32.totalorder %s15, 0
    %p75 = por %p73, %p74
    %p76 = scmp.ne.s32.totalorder %s65, %s68
    %p77 = scmp.eq.s32.totalorder %s20, 1
    %p78 = por %p76, %p77
    %p79 = scmp.ne.s32.totalorder %s68, %s69
    %p80 = scmp.eq.s32.totalorder %s20, 0
    %p81 = por %p79, %p80
    %p82 = scmp.ne.s32.totalorder %s68, %s69
    %p83 = scmp.eq.s32.totalorder %s21, 1
    %p84 = por %p82, %p83
    %p86 = scmp.ne.s32.totalorder %s69, %s85
    %p87 = scmp.eq.s32.totalorder %s21, 0
    %p88 = por %p86, %p87
    %s90 = sadd.s32 %s89, 1
    %p93 = scmp.eq.s32.totalorder %s15, 1
    %p94 = scmp.ne.s32.totalorder %s89, %s91
    %p95 = scmp.eq.s32.totalorder %s15, 0
    %p96 = por %p94, %p95
    %p97 = scmp.ne.s32.totalorder %s89, %s91
    %p98 = scmp.eq.s32.totalorder %s20, 1
    %p99 = por %p97, %p98
    %p100 = scmp.ne.s32.totalorder %s91, %s92
    %p101 = scmp.eq.s32.totalorder %s20, 0
    %p102 = por %p100, %p101
    %p103 = scmp.ne.s32.totalorder %s91, %s92
    %p104 = scmp.eq.s32.totalorder %s21, 1
    %p105 = por %p103, %p104
    %p107 = scmp.ne.s32.totalorder %s92, %s106
    %p108 = scmp.eq.s32.totalorder %s21, 0
    %p109 = por %p107, %p108
    %s111 = sadd.s32 %s110, 1
    %p114 = scmp.eq.s32.totalorder %s15, 1
    %p115 = scmp.ne.s32.totalorder %s110, %s112
    %p116 = scmp.eq.s32.totalorder %s15, 0
    %p117 = por %p115, %p116
    %p118 = scmp.ne.s32.totalorder %s110, %s112
    %p119 = scmp.eq.s32.totalorder %s20, 1
    %p120 = por %p118, %p119
    %p121 = scmp.ne.s32.totalorder %s112, %s113
    %p122 = scmp.eq.s32.totalorder %s20, 0
    %p123 = por %p121, %p122
    %p124 = scmp.ne.s32.totalorder %s112, %s113
    %p125 = scmp.eq.s32.totalorder %s21, 1
    %p126 = por %p124, %p125
    %p128 = scmp.ne.s32.totalorder %s113, %s127
    %p129 = scmp.eq.s32.totalorder %s21, 0
    %p130 = por %p128, %p129
    %s132 = sadd.s32 %s131, 1
    %p135 = scmp.eq.s32.totalorder %s15, 1
    %p136 = scmp.ne.s32.totalorder %s131, %s133
    %p137 = scmp.eq.s32.totalorder %s15, 0
    %p138 = por %p136, %p137
    %p139 = scmp.ne.s32.totalorder %s131, %s133
    %p140 = scmp.eq.s32.totalorder %s20, 1
    %p141 = por %p139, %p140
    %p142 = scmp.ne.s32.totalorder %s133, %s134
    %p143 = scmp.eq.s32.totalorder %s20, 0
    %p144 = por %p142, %p143
    %p145 = scmp.ne.s32.totalorder %s133, %s134
    %p146 = scmp.eq.s32.totalorder %s21, 1
    %p147 = por %p145, %p146
    %p149 = scmp.ne.s32.totalorder %s134, %s148
    %p150 = scmp.eq.s32.totalorder %s21, 0
    %p151 = por %p149, %p150
    %s153 = sadd.s32 %s152, 1
    %p156 = scmp.eq.s32.totalorder %s15, 1
    %p157 = scmp.ne.s32.totalorder %s152, %s154
    %p158 = scmp.eq.s32.totalorder %s15, 0
    %p159 = por %p157, %p158
    %p160 = scmp.ne.s32.totalorder %s152, %s154
    %p161 = scmp.eq.s32.totalorder %s20, 1
    %p162 = por %p160, %p161
    %p163 = scmp.ne.s32.totalorder %s154, %s155
    %p164 = scmp.eq.s32.totalorder %s20, 0
    %p165 = por %p163, %p164
    %p166 = scmp.ne.s32.totalorder %s154, %s155
    %p167 = scmp.eq.s32.totalorder %s21, 1
    %p168 = por %p166, %p167
    %p170 = scmp.ne.s32.totalorder %s155, %s169
    %p171 = scmp.eq.s32.totalorder %s21, 0
    %p172 = por %p170, %p171
    %s174 = sadd.s32 %s173, 1
    %p177 = scmp.eq.s32.totalorder %s15, 1
    %p178 = scmp.ne.s32.totalorder %s173, %s175
    %p179 = scmp.eq.s32.totalorder %s15, 0
    %p180 = por %p178, %p179
    %p181 = scmp.ne.s32.totalorder %s173, %s175
    %p182 = scmp.eq.s32.totalorder %s20, 1
    %p183 = por %p181, %p182
    %p184 = scmp.ne.s32.totalorder %s175, %s176
    %p185 = scmp.eq.s32.totalorder %s20, 0
    %p186 = por %p184, %p185
    %p187 = scmp.ne.s32.totalorder %s175, %s176
    %p188 = scmp.eq.s32.totalorder %s21, 1
    %p189 = por %p187, %p188
    %p191 = scmp.ne.s32.totalorder %s176, %s190
    %p192 = scmp.eq.s32.totalorder %s21, 0
    %p193 = por %p191, %p192
    %s195 = sadd.s32 %s194, 1
    %p198 = scmp.eq.s32.totalorder %s15, 1
    %p199 = scmp.ne.s32.totalorder %s194, %s196
    %p200 = scmp.eq.s32.totalorder %s15, 0
    %p201 = por %p199, %p200
    %p202 = scmp.ne.s32.totalorder %s194, %s196
    %p203 = scmp.eq.s32.totalorder %s20, 1
    %p204 = por %p202, %p203
    %p205 = scmp.ne.s32.totalorder %s196, %s197
    %p206 = scmp.eq.s32.totalorder %s20, 0
    %p207 = por %p205, %p206
    %p208 = scmp.ne.s32.totalorder %s196, %s197
    %p209 = scmp.eq.s32.totalorder %s21, 1
    %p210 = por %p208, %p209
    %p212 = scmp.ne.s32.totalorder %s197, %s211
    %p213 = scmp.eq.s32.totalorder %s21, 0
    %p214 = por %p212, %p213
    %s216 = sadd.s32 %s215, 1
    %p219 = scmp.eq.s32.totalorder %s15, 1
    %p220 = scmp.ne.s32.totalorder %s215, %s217
    %p221 = scmp.eq.s32.totalorder %s15, 0
    %p222 = por %p220, %p221
    %p223 = scmp.ne.s32.totalorder %s215, %s217
    %p224 = scmp.eq.s32.totalorder %s20, 1
    %p225 = por %p223, %p224
    %p226 = scmp.ne.s32.totalorder %s217, %s218
    %p227 = scmp.eq.s32.totalorder %s20, 0
    %p228 = por %p226, %p227
    %p229 = scmp.ne.s32.totalorder %s217, %s218
    %p230 = scmp.eq.s32.totalorder %s21, 1
    %p231 = por %p229, %p230
    %p233 = scmp.ne.s32.totalorder %s218, %s232
    %p234 = scmp.eq.s32.totalorder %s21, 0
    %p235 = por %p233, %p234
    %s236 = ssub.s32 %s22, %s34
    %s237 = ssub.s32 %s23, %s30
    %s238 = sor.u32 %s236, %s237
    %p239 = scmp.eq.s32.totalorder %s238, 0
    %s241 = sadd.s32 %s240, 1
    %s242 = scalar_select %p239, %s240, %s241
    %p245 = pneg %p239
    %p246 = scmp.eq.s32.totalorder %s15, 1
    %p247 = por %p245, %p246
    %p248 = scmp.ne.s32.totalorder %s240, %s243
    %p249 = scmp.eq.s32.totalorder %s15, 0
    %p250 = por %p248, %p249
    %p251 = scmp.ne.s32.totalorder %s240, %s243
    %p252 = scmp.eq.s32.totalorder %s20, 1
    %p253 = por %p251, %p252
    %p254 = scmp.ne.s32.totalorder %s243, %s244
    %p255 = scmp.eq.s32.totalorder %s20, 0
    %p256 = por %p254, %p255
    %p257 = scmp.ne.s32.totalorder %s243, %s244
    %p258 = scmp.eq.s32.totalorder %s21, 1
    %p259 = por %p257, %p258
    %p261 = scmp.ne.s32.totalorder %s244, %s260
    %p262 = scmp.eq.s32.totalorder %s21, 0
    %p263 = por %p261, %p262
    %p264 = scmp.le.s32.totalorder 1, %s15
    %p265 = scmp.lt.s32.totalorder %s15, 3
    %p266 = pnand %p264, %p265
    %p267 = pneg %p266
    // Predicated region
    $region9: #{net_forward.1} parent=5 // pred_check
      _
    $region10: #{net_forward.1} parent=5 // pred_check_branch
      %269 = sbr.rel (%p266) target = $region12
    $region11: #{net_forward.1} parent=5 // pred_region
      %s270 = ssub.s32 %s15, 1
      // Predicated region
      $region13: #{net_forward.1} parent=11 // pred_check
        %p271 = pneg %p102
      $region14: #{net_forward.1} parent=11 // pred_check_branch
        %273 = sbr.rel (%p271) target = $region16
      $region15: #{net_forward.1} parent=11 // pred_region
        _
      $region16: #{net_forward.1} parent=11 // pred_fallthru
        _
      // Predicated region
      $region17: #{net_forward.1} parent=11 // pred_check
        %p274 = pneg %p123
      $region18: #{net_forward.1} parent=11 // pred_check_branch
        %276 = sbr.rel (%p274) target = $region20
      $region19: #{net_forward.1} parent=11 // pred_region
        _
      $region20: #{net_forward.1} parent=11 // pred_fallthru
        _
      // Predicated region
      $region21: #{net_forward.1} parent=11 // pred_check
        %p277 = pneg %p144
      $region22: #{net_forward.1} parent=11 // pred_check_branch
        %279 = sbr.rel (%p277) target = $region24
      $region23: #{net_forward.1} parent=11 // pred_region
        _
      $region24: #{net_forward.1} parent=11 // pred_fallthru
        _
      // Predicated region
      $region25: #{net_forward.1} parent=11 // pred_check
        %p280 = pneg %p165
      $region26: #{net_forward.1} parent=11 // pred_check_branch
        %282 = sbr.rel (%p280) target = $region28
      $region27: #{net_forward.1} parent=11 // pred_region
        _
      $region28: #{net_forward.1} parent=11 // pred_fallthru
        _
      // Predicated region
      $region29: #{net_forward.1} parent=11 // pred_check
        %p283 = pneg %p186
      $region30: #{net_forward.1} parent=11 // pred_check_branch
        %285 = sbr.rel (%p283) target = $region32
      $region31: #{net_forward.1} parent=11 // pred_region
        _
      $region32: #{net_forward.1} parent=11 // pred_fallthru
        _
      // Predicated region
      $region33: #{net_forward.1} parent=11 // pred_check
        %p286 = pneg %p207
      $region34: #{net_forward.1} parent=11 // pred_check_branch
        %288 = sbr.rel (%p286) target = $region36
      $region35: #{net_forward.1} parent=11 // pred_region
        _
      $region36: #{net_forward.1} parent=11 // pred_fallthru
        _
      // Predicated region
      $region37: #{net_forward.1} parent=11 // pred_check
        %p289 = pneg %p228
      $region38: #{net_forward.1} parent=11 // pred_check_branch
        %291 = sbr.rel (%p289) target = $region40
      $region39: #{net_forward.1} parent=11 // pred_region
        _
      $region40: #{net_forward.1} parent=11 // pred_fallthru
        _
    $region12: #{net_forward.1} parent=5 // pred_fallthru
      _
    %p292 = scmp.lt.s32.totalorder %s15, 2
    // Predicated region
    $region41: #{net_forward.1} parent=5 // pred_check
      %p293 = pneg %p292
    $region42: #{net_forward.1} parent=5 // pred_check_branch
      %295 = sbr.rel (%p293) target = $region44
    $region43: #{net_forward.1} parent=5 // pred_region
      // Predicated region
      $region45: #{net_forward.1} parent=43 // pred_check
        %p296 = pneg %p49
      $region46: #{net_forward.1} parent=43 // pred_check_branch
        %298 = sbr.rel (%p296) target = $region48
      $region47: #{net_forward.1} parent=43 // pred_region
        %s299 = smul.u32 2, %s23
        %p300 = scmp.lt.s32.totalorder %s22, 1
        %s301 = scalar_select %p300, %s22, 1
        %p302 = scmp.lt.s32.totalorder %s299, 1
        %s303 = scalar_select %p302, %s299, 1
        %s304 = smul.addr %s301, 2
        %s305 = sadd.s32 %s303, %s304
        %s306 = smul.addr %s305, 2
        %s307 = scalar_lea.vmem %s0, %s306
        %s308 = smul.u32 2, %s23
      $region48: #{net_forward.1} parent=43 // pred_fallthru
        _
      // Predicated region
      $region49: #{net_forward.1} parent=43 // pred_check
        %p309 = pneg %p75
      $region50: #{net_forward.1} parent=43 // pred_check_branch
        %311 = sbr.rel (%p309) target = $region52
      $region51: #{net_forward.1} parent=43 // pred_region
        %p312 = scmp.lt.s32.totalorder %s22, 1
        %s313 = scalar_select %p312, %s22, 1
        %s314 = smul.addr %s313, 16
        %s315 = smul.addr %s314, 8
        %s316 = scalar_lea.vmem %s1, %s315
      $region52: #{net_forward.1} parent=43 // pred_fallthru
        _
    $region44: #{net_forward.1} parent=5 // pred_fallthru
      _
    %p317 = scmp.le.s32.totalorder 1, %s15
    %p318 = scmp.lt.s32.totalorder %s15, 3
    %p319 = pnand %p317, %p318
    %p320 = pneg %p319
    // Predicated region
    $region53: #{net_forward.1} parent=5 // pred_check
      _
    $region54: #{net_forward.1} parent=5 // pred_check_branch
      %322 = sbr.rel (%p319) target = $region56
    $region55: #{net_forward.1} parent=5 // pred_region
      %s323 = ssub.s32 %s15, 1
      %s324 = smul.u32 2, %s25
      %p325 = scmp.lt.s32.totalorder %s24, 1
      %s326 = scalar_select %p325, %s24, 1
      %p327 = scmp.lt.s32.totalorder %s324, 1
      %s328 = scalar_select %p327, %s324, 1
      %s329 = smul.addr %s326, 2
      %s330 = sadd.s32 %s328, %s329
      %s331 = smul.addr %s330, 2
      %s332 = scalar_lea.vmem %s0, %s331
      %p333 = pneg %p55
      %p334 = pneg %p52
      %p335 = scmp.lt.s32.totalorder %s24, 1
      %s336 = scalar_select %p335, %s24, 1
      %s337 = smul.addr %s336, 16
      %s338 = smul.addr %s337, 8
      %s339 = scalar_lea.vmem %s1, %s338
      %p340 = pneg %p81
      %p341 = pneg %p78
      %p342 = pneg %p102
      %p343 = pneg %p99
      %p344 = pneg %p123
      %p345 = pneg %p120
      %p346 = pneg %p144
      %p347 = pneg %p141
      %p348 = pneg %p165
      %p349 = pneg %p162
      %p350 = pneg %p186
      %p351 = pneg %p183
      %p352 = pneg %p207
      %p353 = pneg %p204
      %p354 = pneg %p228
      %p355 = pneg %p225
      %p356 = pneg %p256
      %p357 = pneg %p253
      %s358 = smul.u32 2, %s25
      %p359 = scmp.lt.s32.totalorder %s24, 1
      %s360 = scalar_select %p359, %s24, 1
      %p361 = scmp.lt.s32.totalorder %s358, 1
      %s362 = scalar_select %p361, %s358, 1
      %s363 = smul.addr %s360, 2
      %s364 = sadd.s32 %s362, %s363
      %s365 = smul.addr %s364, 4
      %s366 = scalar_lea.vmem %s9, %s365
      %s367 = smul.u32 2, %s25
      %p368 = scmp.lt.s32.totalorder %s24, 1
      %s369 = scalar_select %p368, %s24, 1
      %p370 = scmp.lt.s32.totalorder %s367, 1
      %s371 = scalar_select %p370, %s367, 1
      %s372 = smul.addr %s369, 2
      %s373 = sadd.s32 %s371, %s372
      %s374 = smul.addr %s373, 2
      %s375 = scalar_lea.vmem %s0, %s374
      %s376 = smul.u32 2, %s25
      %p377 = scmp.lt.s32.totalorder %s24, 1
      %s378 = scalar_select %p377, %s24, 1
      %s379 = smul.addr %s378, 16
      %s380 = smul.addr %s379, 8
      %s381 = scalar_lea.vmem %s1, %s380
      %s382 = smul.u32 2, %s25
      %p383 = scmp.lt.s32.totalorder %s24, 1
      %s384 = scalar_select %p383, %s24, 1
      %p385 = scmp.lt.s32.totalorder %s382, 1
      %s386 = scalar_select %p385, %s382, 1
      %s387 = smul.addr %s384, 2
      %s388 = sadd.s32 %s386, %s387
      %s389 = smul.addr %s388, 4
      %s390 = scalar_lea.vmem %s9, %s389
      %s391 = smul.u32 2, %s25
      %v393 = vld [vmem:[%s375] sm:$0xf]
      %v394 = vld [vmem:[%s381] sm:$0xff]
      %v395 = vld [vmem:[%s381 + $0x8] sm:$0xff]
      %v396 = vld [vmem:[%s381 + $0x10] sm:$0xff]
      %v397 = vld [vmem:[%s381 + $0x18] sm:$0xff]
      %v398 = vld [vmem:[%s381 + $0x20] sm:$0xff]
      %v399 = vld [vmem:[%s381 + $0x28] sm:$0xff]
      %v400 = vld [vmem:[%s381 + $0x30] sm:$0xff]
      %v401 = vld [vmem:[%s381 + $0x38] sm:$0xff]
      %v402 = vld [vmem:[%s381 + $0x40] sm:$0xff]
      %v403 = vld [vmem:[%s381 + $0x48] sm:$0xff]
      %v404 = vld [vmem:[%s381 + $0x50] sm:$0xff]
      %v405 = vld [vmem:[%s381 + $0x58] sm:$0xff]
      %v406 = vld [vmem:[%s381 + $0x60] sm:$0xff]
      %v407 = vld [vmem:[%s381 + $0x68] sm:$0xff]
      %v408 = vld [vmem:[%s381 + $0x70] sm:$0xff]
      %v409 = vld [vmem:[%s381 + $0x78] sm:$0xff]
      %v410 = vld [vmem:[%s2] sm:$0xf]
      %v411 = vld [vmem:[%s2 + $0x4] sm:$0xf]
      %v412 = vld [vmem:[%s2 + $0x8] sm:$0xf]
      %v413 = vld [vmem:[%s2 + $0xc] sm:$0xf]
      %v414 = vld [vmem:[%s2 + $0x10] sm:$0xf]
      %v415 = vld [vmem:[%s2 + $0x14] sm:$0xf]
      %v416 = vld [vmem:[%s2 + $0x18] sm:$0xf]
      %v417 = vld [vmem:[%s2 + $0x1c] sm:$0xf]
      %v418 = vld [vmem:[%s2 + $0x20] sm:$0xf]
      %v419 = vld [vmem:[%s2 + $0x24] sm:$0xf]
      %v420 = vld [vmem:[%s2 + $0x28] sm:$0xf]
      %v421 = vld [vmem:[%s2 + $0x2c] sm:$0xf]
      %v422 = vld [vmem:[%s2 + $0x30] sm:$0xf]
      %v423 = vld [vmem:[%s2 + $0x34] sm:$0xf]
      %v424 = vld [vmem:[%s2 + $0x38] sm:$0xf]
      %v425 = vld [vmem:[%s2 + $0x3c] sm:$0xf]
      %v426 = vld [vmem:[%s3] sm:$0xff]
      %v427 = vld [vmem:[%s3 + $0x8] sm:$0xff]
      %v428 = vld [vmem:[%s3 + $0x10] sm:$0xff]
      %v429 = vld [vmem:[%s3 + $0x18] sm:$0xff]
      %v430 = vld [vmem:[%s3 + $0x20] sm:$0xff]
      %v431 = vld [vmem:[%s3 + $0x28] sm:$0xff]
      %v432 = vld [vmem:[%s3 + $0x30] sm:$0xff]
      %v433 = vld [vmem:[%s3 + $0x38] sm:$0xff]
      %v434 = vld [vmem:[%s3 + $0x40] sm:$0xff]
      %v435 = vld [vmem:[%s3 + $0x48] sm:$0xff]
      %v436 = vld [vmem:[%s3 + $0x50] sm:$0xff]
      %v437 = vld [vmem:[%s3 + $0x58] sm:$0xff]
      %v438 = vld [vmem:[%s3 + $0x60] sm:$0xff]
      %v439 = vld [vmem:[%s3 + $0x68] sm:$0xff]
      %v440 = vld [vmem:[%s3 + $0x70] sm:$0xff]
      %v441 = vld [vmem:[%s3 + $0x78] sm:$0xff]
      %443 = vset.pattern.permute.xlu0 0
      %444 = vperm.xlu0 %443, %v426
      %v445 = vpop.permute.xlu0 %444
      %448 = vset.pattern.permute.xlu0 0
      %449 = vperm.xlu0 %448, %v427
      %v450 = vpop.permute.xlu0 %449
      %453 = vset.pattern.permute.xlu0 0
      %454 = vperm.xlu0 %453, %v428
      %v455 = vpop.permute.xlu0 %454
      %458 = vset.pattern.permute.xlu0 0
      %459 = vperm.xlu0 %458, %v429
      %v460 = vpop.permute.xlu0 %459
      %463 = vset.pattern.permute.xlu0 0
      %464 = vperm.xlu0 %463, %v430
      %v465 = vpop.permute.xlu0 %464
      %468 = vset.pattern.permute.xlu0 0
      %469 = vperm.xlu0 %468, %v431
      %v470 = vpop.permute.xlu0 %469
      %473 = vset.pattern.permute.xlu0 0
      %474 = vperm.xlu0 %473, %v432
      %v475 = vpop.permute.xlu0 %474
      %478 = vset.pattern.permute.xlu0 0
      %479 = vperm.xlu0 %478, %v433
      %v480 = vpop.permute.xlu0 %479
      %483 = vset.pattern.permute.xlu0 0
      %484 = vperm.xlu0 %483, %v434
      %v485 = vpop.permute.xlu0 %484
      %488 = vset.pattern.permute.xlu0 0
      %489 = vperm.xlu0 %488, %v435
      %v490 = vpop.permute.xlu0 %489
      %493 = vset.pattern.permute.xlu0 0
      %494 = vperm.xlu0 %493, %v436
      %v495 = vpop.permute.xlu0 %494
      %498 = vset.pattern.permute.xlu0 0
      %499 = vperm.xlu0 %498, %v437
      %v500 = vpop.permute.xlu0 %499
      %503 = vset.pattern.permute.xlu0 0
      %504 = vperm.xlu0 %503, %v438
      %v505 = vpop.permute.xlu0 %504
      %508 = vset.pattern.permute.xlu0 0
      %509 = vperm.xlu0 %508, %v439
      %v510 = vpop.permute.xlu0 %509
      %513 = vset.pattern.permute.xlu0 0
      %514 = vperm.xlu0 %513, %v440
      %v515 = vpop.permute.xlu0 %514
      %518 = vset.pattern.permute.xlu0 0
      %519 = vperm.xlu0 %518, %v441
      %v520 = vpop.permute.xlu0 %519
      %v538 = vunpack.c.l.b16 %v410
      %v539 = vunpack.c.l.b16 %v411
      %v540 = vunpack.c.l.b16 %v412
      %v541 = vunpack.c.l.b16 %v413
      %v542 = vunpack.c.l.b16 %v414
      %v543 = vunpack.c.l.b16 %v415
      %v544 = vunpack.c.l.b16 %v416
      %v545 = vunpack.c.l.b16 %v417
      %v546 = vunpack.c.l.b16 %v418
      %v547 = vunpack.c.l.b16 %v419
      %v548 = vunpack.c.l.b16 %v420
      %v549 = vunpack.c.l.b16 %v421
      %v550 = vunpack.c.l.b16 %v422
      %v551 = vunpack.c.l.b16 %v423
      %v552 = vunpack.c.l.b16 %v424
      %v553 = vunpack.c.l.b16 %v425
      %v554 = vpack.c.b16 %v539, %v538
      %v555 = vpack.c.b16 %v541, %v540
      %v556 = vpack.c.b16 %v543, %v542
      %v557 = vpack.c.b16 %v545, %v544
      %v558 = vpack.c.b16 %v547, %v546
      %v559 = vpack.c.b16 %v549, %v548
      %v560 = vpack.c.b16 %v551, %v550
      %v561 = vpack.c.b16 %v553, %v552
      %v564 = vunpack.c.l.s4 1983009808
      %v565 = vunpack.c.0.s8 %v564
      %v566 = vlaneseq
      %v567 = vshrl.u32 %v566, 7
      %v568 = vsub.s32 %v565, %v567
      %v569 = vrot.slane %v393, %v568
      %v570 = vcombine.high %v569, %v569
      %vm571 = vcmask 31744
      %v573 = vsel %vm571, %v554, 0
      %v576 = vsel %vm571, %v555, 0
      %v579 = vsel %vm571, %v556, 0
      %v582 = vsel %vm571, %v557, 0
      %v585 = vsel %vm571, %v558, 0
      %v588 = vsel %vm571, %v559, 0
      %v591 = vsel %vm571, %v560, 0
      %v594 = vsel %vm571, %v561, 0
      %vm596 = vcmask 1041408
      %v598 = vsel %vm596, %v569, 0
      %v601 = vsel %vm596, %v570, 0
      %603 = vmatprep.subr.bf16.mxu0 %v601
      %604 = vmatpush1.bf16.msra.mxu0 %v598
      %605 = vmatprep.subr.bf16.mxu0 0
      %606 = vmatpush1.bf16.msra.mxu0 0
      %607 = vmatprep.subr.bf16.mxu0 0
      %608 = vmatpush1.bf16.msra.mxu0 0
      %609 = vmatprep.subr.bf16.mxu0 0
      %610 = vmatpush1.bf16.msra.mxu0 0
      %611 = vmatprep.subr.bf16.mxu0 0
      %612 = vmatpush1.bf16.msra.mxu0 0
      %613 = vmatprep.subr.bf16.mxu0 0
      %614 = vmatpush1.bf16.msra.mxu0 0
      %615 = vmatprep.subr.bf16.mxu0 0
      %616 = vmatpush1.bf16.msra.mxu0 0
      %617 = vmatprep.subr.bf16.mxu0 0
      %618 = vmatpush1.bf16.msra.mxu0 0
      %619 = vmatprep.subr.bf16.mxu0 0
      %620 = vmatpush1.bf16.msra.mxu0 0
      %621 = vmatprep.subr.bf16.mxu0 0
      %622 = vmatpush1.bf16.msra.mxu0 0
      %623 = vmatprep.subr.bf16.mxu0 0
      %624 = vmatpush1.bf16.msra.mxu0 0
      %625 = vmatprep.subr.bf16.mxu0 0
      %626 = vmatpush1.bf16.msra.mxu0 0
      %627 = vmatprep.subr.bf16.mxu0 0
      %628 = vmatpush1.bf16.msra.mxu0 0
      %629 = vmatprep.subr.bf16.mxu0 0
      %630 = vmatpush1.bf16.msra.mxu0 0
      %631 = vmatprep.subr.bf16.mxu0 0
      %632 = vmatpush1.bf16.msra.mxu0 0
      %633 = vmatprep.subr.bf16.mxu0 0
      %634 = vmatpush1.bf16.msra.mxu0 0
      %635 = vmatprep.mubr.bf16.mxu0 0
      %636 = vmatmul.mubr.bf16.gmra.mrb[0].mxu0 %v573
      %v637 = vpop.f32.mrb[0].mxu0
      %v638 = vadd.f32 %v445, %v637
      %v639 = vpop.f32.mrb[0].mxu0
      %v640 = vadd.f32 %v445, %v639
      %v641 = vpop.f32.mrb[0].mxu0
      %v642 = vadd.f32 %v450, %v641
      %v643 = vpop.f32.mrb[0].mxu0
      %v644 = vadd.f32 %v450, %v643
      %645 = vmatprep.mubr.bf16.mxu0 0
      %646 = vmatmul.mubr.bf16.gmra.mrb[0].mxu0 %v576
      %v647 = vpop.f32.mrb[0].mxu0
      %v648 = vadd.f32 %v455, %v647
      %v649 = vpop.f32.mrb[0].mxu0
      %v650 = vadd.f32 %v455, %v649
      %v651 = vpop.f32.mrb[0].mxu0
      %v652 = vadd.f32 %v460, %v651
      %v653 = vpop.f32.mrb[0].mxu0
      %v654 = vadd.f32 %v460, %v653
      %655 = vmatprep.mubr.bf16.mxu0 0
      %656 = vmatmul.mubr.bf16.gmra.mrb[0].mxu0 %v579
      %v657 = vpop.f32.mrb[0].mxu0
      %v658 = vadd.f32 %v465, %v657
      %v659 = vpop.f32.mrb[0].mxu0
      %v660 = vadd.f32 %v465, %v659
      %v661 = vpop.f32.mrb[0].mxu0
      %v662 = vadd.f32 %v470, %v661
      %v663 = vpop.f32.mrb[0].mxu0
      %v664 = vadd.f32 %v470, %v663
      %665 = vmatprep.mubr.bf16.mxu0 0
      %666 = vmatmul.mubr.bf16.gmra.mrb[0].mxu0 %v582
      %v667 = vpop.f32.mrb[0].mxu0
      %v668 = vadd.f32 %v475, %v667
      %v669 = vpop.f32.mrb[0].mxu0
      %v670 = vadd.f32 %v475, %v669
      %v671 = vpop.f32.mrb[0].mxu0
      %v672 = vadd.f32 %v480, %v671
      %v673 = vpop.f32.mrb[0].mxu0
      %v674 = vadd.f32 %v480, %v673
      %675 = vmatprep.mubr.bf16.mxu0 0
      %676 = vmatmul.mubr.bf16.gmra.mrb[0].mxu0 %v585
      %v677 = vpop.f32.mrb[0].mxu0
      %v678 = vadd.f32 %v485, %v677
      %v679 = vpop.f32.mrb[0].mxu0
      %v680 = vadd.f32 %v485, %v679
      %v681 = vpop.f32.mrb[0].mxu0
      %v682 = vadd.f32 %v490, %v681
      %v683 = vpop.f32.mrb[0].mxu0
      %v684 = vadd.f32 %v490, %v683
      %685 = vmatprep.mubr.bf16.mxu0 0
      %686 = vmatmul.mubr.bf16.gmra.mrb[0].mxu0 %v588
      %v687 = vpop.f32.mrb[0].mxu0
      %v688 = vadd.f32 %v495, %v687
      %v689 = vpop.f32.mrb[0].mxu0
      %v690 = vadd.f32 %v495, %v689
      %v691 = vpop.f32.mrb[0].mxu0
      %v692 = vadd.f32 %v500, %v691
      %v693 = vpop.f32.mrb[0].mxu0
      %v694 = vadd.f32 %v500, %v693
      %695 = vmatprep.mubr.bf16.mxu0 0
      %696 = vmatmul.mubr.bf16.gmra.mrb[0].mxu0 %v591
      %v697 = vpop.f32.mrb[0].mxu0
      %v698 = vadd.f32 %v505, %v697
      %v699 = vpop.f32.mrb[0].mxu0
      %v700 = vadd.f32 %v505, %v699
      %v701 = vpop.f32.mrb[0].mxu0
      %v702 = vadd.f32 %v510, %v701
      %v703 = vpop.f32.mrb[0].mxu0
      %v704 = vadd.f32 %v510, %v703
      %705 = vmatprep.mubr.bf16.mxu0 0
      %706 = vmatmul.mubr.bf16.gmra.mrb[0].mxu0 %v594
      %v707 = vpop.f32.mrb[0].mxu0
      %v708 = vadd.f32 %v515, %v707
      %v709 = vpop.f32.mrb[0].mxu0
      %v710 = vadd.f32 %v515, %v709
      %v711 = vpop.f32.mrb[0].mxu0
      %v712 = vadd.f32 %v520, %v711
      %v713 = vpop.f32.mrb[0].mxu0
      %v714 = vadd.f32 %v520, %v713
      %715 = vdwg.mxu0
      %v716 = vld [vmem:[%s4] sm:$0xf]
      %v717 = vld [vmem:[%s4 + $0x4] sm:$0xf]
      %v718 = vld [vmem:[%s4 + $0x8] sm:$0xf]
      %v719 = vld [vmem:[%s4 + $0xc] sm:$0xf]
      %v720 = vld [vmem:[%s4 + $0x10] sm:$0xf]
      %v721 = vld [vmem:[%s4 + $0x14] sm:$0xf]
      %v722 = vld [vmem:[%s4 + $0x18] sm:$0xf]
      %v723 = vld [vmem:[%s4 + $0x1c] sm:$0xf]
      %v724 = vld [vmem:[%s4 + $0x20] sm:$0xf]
      %v725 = vld [vmem:[%s4 + $0x24] sm:$0xf]
      %v726 = vld [vmem:[%s4 + $0x28] sm:$0xf]
      %v727 = vld [vmem:[%s4 + $0x2c] sm:$0xf]
      %v728 = vld [vmem:[%s4 + $0x30] sm:$0xf]
      %v729 = vld [vmem:[%s4 + $0x34] sm:$0xf]
      %v730 = vld [vmem:[%s4 + $0x38] sm:$0xf]
      %v731 = vld [vmem:[%s4 + $0x3c] sm:$0xf]
      %v732 = vmul.f32 %v638, 0.5
      %v733 = vmul.f32 %v640, 0.5
      %v734 = vmul.f32 %v642, 0.5
      %v735 = vmul.f32 %v644, 0.5
      %v736 = vmul.f32 %v648, 0.5
      %v737 = vmul.f32 %v650, 0.5
      %v738 = vmul.f32 %v652, 0.5
      %v739 = vmul.f32 %v654, 0.5
      %v740 = vmul.f32 %v658, 0.5
      %v741 = vmul.f32 %v660, 0.5
      %v742 = vmul.f32 %v662, 0.5
      %v743 = vmul.f32 %v664, 0.5
      %v744 = vmul.f32 %v668, 0.5
      %v745 = vmul.f32 %v670, 0.5
      %v746 = vmul.f32 %v672, 0.5
      %v747 = vmul.f32 %v674, 0.5
      %v748 = vmul.f32 %v678, 0.5
      %v749 = vmul.f32 %v680, 0.5
      %v750 = vmul.f32 %v682, 0.5
      %v751 = vmul.f32 %v684, 0.5
      %v752 = vmul.f32 %v688, 0.5
      %v753 = vmul.f32 %v690, 0.5
      %v754 = vmul.f32 %v692, 0.5
      %v755 = vmul.f32 %v694, 0.5
      %v756 = vmul.f32 %v698, 0.5
      %v757 = vmul.f32 %v700, 0.5
      %v758 = vmul.f32 %v702, 0.5
      %v759 = vmul.f32 %v704, 0.5
      %v760 = vmul.f32 %v708, 0.5
      %v761 = vmul.f32 %v710, 0.5
      %v762 = vmul.f32 %v712, 0.5
      %v763 = vmul.f32 %v714, 0.5
      %v764 = vtanh.pop %v732
      %v765 = vtanh.pop %v733
      %v766 = vtanh.pop %v734
      %v767 = vtanh.pop %v735
      %v768 = vtanh.pop %v736
      %v769 = vtanh.pop %v737
      %v770 = vtanh.pop %v738
      %v771 = vtanh.pop %v739
      %v772 = vtanh.pop %v740
      %v773 = vtanh.pop %v741
      %v774 = vtanh.pop %v742
      %v775 = vtanh.pop %v743
      %v776 = vtanh.pop %v744
      %v777 = vtanh.pop %v745
      %v778 = vtanh.pop %v746
      %v779 = vtanh.pop %v747
      %v780 = vtanh.pop %v748
      %v781 = vtanh.pop %v749
      %v782 = vtanh.pop %v750
      %v783 = vtanh.pop %v751
      %v784 = vtanh.pop %v752
      %v785 = vtanh.pop %v753
      %v786 = vtanh.pop %v754
      %v787 = vtanh.pop %v755
      %v788 = vtanh.pop %v756
      %v789 = vtanh.pop %v757
      %v790 = vtanh.pop %v758
      %v791 = vtanh.pop %v759
      %v792 = vtanh.pop %v760
      %v793 = vtanh.pop %v761
      %v794 = vtanh.pop %v762
      %v795 = vtanh.pop %v763
      %v796 = vadd.f32 %v764, 1.0
      %v797 = vadd.f32 %v765, 1.0
      %v798 = vadd.f32 %v766, 1.0
      %v799 = vadd.f32 %v767, 1.0
      %v800 = vadd.f32 %v768, 1.0
      %v801 = vadd.f32 %v769, 1.0
      %v802 = vadd.f32 %v770, 1.0
      %v803 = vadd.f32 %v771, 1.0
      %v804 = vadd.f32 %v772, 1.0
      %v805 = vadd.f32 %v773, 1.0
      %v806 = vadd.f32 %v774, 1.0
      %v807 = vadd.f32 %v775, 1.0
      %v808 = vadd.f32 %v776, 1.0
      %v809 = vadd.f32 %v777, 1.0
      %v810 = vadd.f32 %v778, 1.0
      %v811 = vadd.f32 %v779, 1.0
      %v812 = vadd.f32 %v780, 1.0
      %v813 = vadd.f32 %v781, 1.0
      %v814 = vadd.f32 %v782, 1.0
      %v815 = vadd.f32 %v783, 1.0
      %v816 = vadd.f32 %v784, 1.0
      %v817 = vadd.f32 %v785, 1.0
      %v818 = vadd.f32 %v786, 1.0
      %v819 = vadd.f32 %v787, 1.0
      %v820 = vadd.f32 %v788, 1.0
      %v821 = vadd.f32 %v789, 1.0
      %v822 = vadd.f32 %v790, 1.0
      %v823 = vadd.f32 %v791, 1.0
      %v824 = vadd.f32 %v792, 1.0
      %v825 = vadd.f32 %v793, 1.0
      %v826 = vadd.f32 %v794, 1.0
      %v827 = vadd.f32 %v795, 1.0
      %v828 = vmul.f32 %v732, %v796
      %v829 = vmul.f32 %v733, %v797
      %v830 = vmul.f32 %v734, %v798
      %v831 = vmul.f32 %v735, %v799
      %v832 = vmul.f32 %v736, %v800
      %v833 = vmul.f32 %v737, %v801
      %v834 = vmul.f32 %v738, %v802
      %v835 = vmul.f32 %v739, %v803
      %v836 = vmul.f32 %v740, %v804
      %v837 = vmul.f32 %v741, %v805
      %v838 = vmul.f32 %v742, %v806
      %v839 = vmul.f32 %v743, %v807
      %v840 = vmul.f32 %v744, %v808
      %v841 = vmul.f32 %v745, %v809
      %v842 = vmul.f32 %v746, %v810
      %v843 = vmul.f32 %v747, %v811
      %v844 = vmul.f32 %v748, %v812
      %v845 = vmul.f32 %v749, %v813
      %v846 = vmul.f32 %v750, %v814
      %v847 = vmul.f32 %v751, %v815
      %v848 = vmul.f32 %v752, %v816
      %v849 = vmul.f32 %v753, %v817
      %v850 = vmul.f32 %v754, %v818
      %v851 = vmul.f32 %v755, %v819
      %v852 = vmul.f32 %v756, %v820
      %v853 = vmul.f32 %v757, %v821
      %v854 = vmul.f32 %v758, %v822
      %v855 = vmul.f32 %v759, %v823
      %v856 = vmul.f32 %v760, %v824
      %v857 = vmul.f32 %v761, %v825
      %v858 = vmul.f32 %v762, %v826
      %v859 = vmul.f32 %v763, %v827
      %v860 = vpack.c.bf16 %v830, %v828
      %v861 = vpack.c.bf16 %v831, %v829
      %v862 = vpack.c.bf16 %v834, %v832
      %v863 = vpack.c.bf16 %v835, %v833
      %v864 = vpack.c.bf16 %v838, %v836
      %v865 = vpack.c.bf16 %v839, %v837
      %v866 = vpack.c.bf16 %v842, %v840
      %v867 = vpack.c.bf16 %v843, %v841
      %v868 = vpack.c.bf16 %v846, %v844
      %v869 = vpack.c.bf16 %v847, %v845
      %v870 = vpack.c.bf16 %v850, %v848
      %v871 = vpack.c.bf16 %v851, %v849
      %v872 = vpack.c.bf16 %v854, %v852
      %v873 = vpack.c.bf16 %v855, %v853
      %v874 = vpack.c.bf16 %v858, %v856
      %v875 = vpack.c.bf16 %v859, %v857
      %877 = vset.pattern.permute.xlu0 0
      %878 = vperm.xlu0 %877, %v394
      %v879 = vpop.permute.xlu0 %878
      %882 = vset.pattern.permute.xlu0 0
      %883 = vperm.xlu0 %882, %v395
      %v884 = vpop.permute.xlu0 %883
      %887 = vset.pattern.permute.xlu0 0
      %888 = vperm.xlu0 %887, %v396
      %v889 = vpop.permute.xlu0 %888
      %892 = vset.pattern.permute.xlu0 0
      %893 = vperm.xlu0 %892, %v397
      %v894 = vpop.permute.xlu0 %893
      %897 = vset.pattern.permute.xlu0 0
      %898 = vperm.xlu0 %897, %v398
      %v899 = vpop.permute.xlu0 %898
      %902 = vset.pattern.permute.xlu0 0
      %903 = vperm.xlu0 %902, %v399
      %v904 = vpop.permute.xlu0 %903
      %907 = vset.pattern.permute.xlu0 0
      %908 = vperm.xlu0 %907, %v400
      %v909 = vpop.permute.xlu0 %908
      %912 = vset.pattern.permute.xlu0 0
      %913 = vperm.xlu0 %912, %v401
      %v914 = vpop.permute.xlu0 %913
      %917 = vset.pattern.permute.xlu0 0
      %918 = vperm.xlu0 %917, %v402
      %v919 = vpop.permute.xlu0 %918
      %922 = vset.pattern.permute.xlu0 0
      %923 = vperm.xlu0 %922, %v403
      %v924 = vpop.permute.xlu0 %923
      %927 = vset.pattern.permute.xlu0 0
      %928 = vperm.xlu0 %927, %v404
      %v929 = vpop.permute.xlu0 %928
      %932 = vset.pattern.permute.xlu0 0
      %933 = vperm.xlu0 %932, %v405
      %v934 = vpop.permute.xlu0 %933
      %937 = vset.pattern.permute.xlu0 0
      %938 = vperm.xlu0 %937, %v406
      %v939 = vpop.permute.xlu0 %938
      %942 = vset.pattern.permute.xlu0 0
      %943 = vperm.xlu0 %942, %v407
      %v944 = vpop.permute.xlu0 %943
      %947 = vset.pattern.permute.xlu0 0
      %948 = vperm.xlu0 %947, %v408
      %v949 = vpop.permute.xlu0 %948
      %952 = vset.pattern.permute.xlu0 0
      %953 = vperm.xlu0 %952, %v409
      %v954 = vpop.permute.xlu0 %953
      %v972 = vunpack.c.l.b16 %v716
      %v973 = vunpack.c.l.b16 %v717
      %v974 = vunpack.c.l.b16 %v718
      %v975 = vunpack.c.l.b16 %v719
      %v976 = vunpack.c.l.b16 %v720
      %v977 = vunpack.c.l.b16 %v721
      %v978 = vunpack.c.l.b16 %v722
      %v979 = vunpack.c.l.b16 %v723
      %v980 = vunpack.c.l.b16 %v724
      %v981 = vunpack.c.l.b16 %v725
      %v982 = vunpack.c.l.b16 %v726
      %v983 = vunpack.c.l.b16 %v727
      %v984 = vunpack.c.l.b16 %v728
      %v985 = vunpack.c.l.b16 %v729
      %v986 = vunpack.c.l.b16 %v730
      %v987 = vunpack.c.l.b16 %v731
      %v988 = vpack.c.b16 %v973, %v972
      %v989 = vpack.c.b16 %v975, %v974
      %v990 = vpack.c.b16 %v977, %v976
      %v991 = vpack.c.b16 %v979, %v978
      %v992 = vpack.c.b16 %v981, %v980
      %v993 = vpack.c.b16 %v983, %v982
      %v994 = vpack.c.b16 %v985, %v984
      %v995 = vpack.c.b16 %v987, %v986
      %1004 = vmatprep.subr.bf16.mxu0 %v861
      %1005 = vmatpush1.bf16.msra.mxu0 %v860
      %1006 = vmatprep.subr.bf16.mxu0 %v863
      %1007 = vmatpush1.bf16.msra.mxu0 %v862
      %1008 = vmatprep.subr.bf16.mxu0 %v865
      %1009 = vmatpush1.bf16.msra.mxu0 %v864
      %1010 = vmatprep.subr.bf16.mxu0 %v867
      %1011 = vmatpush1.bf16.msra.mxu0 %v866
      %1012 = vmatprep.subr.bf16.mxu0 %v869
      %1013 = vmatpush1.bf16.msra.mxu0 %v868
      %1014 = vmatprep.subr.bf16.mxu0 %v871
      %1015 = vmatpush1.bf16.msra.mxu0 %v870
      %1016 = vmatprep.subr.bf16.mxu0 %v873
      %1017 = vmatpush1.bf16.msra.mxu0 %v872
      %1018 = vmatprep.subr.bf16.mxu0 %v875
      %1019 = vmatpush1.bf16.msra.mxu0 %v874
      %1020 = vmatprep.subr.bf16.mxu0 0
      %1021 = vmatpush1.bf16.msra.mxu0 0
      %1022 = vmatprep.subr.bf16.mxu0 0
      %1023 = vmatpush1.bf16.msra.mxu0 0
      %1024 = vmatprep.subr.bf16.mxu0 0
      %1025 = vmatpush1.bf16.msra.mxu0 0
      %1026 = vmatprep.subr.bf16.mxu0 0
      %1027 = vmatpush1.bf16.msra.mxu0 0
      %1028 = vmatprep.subr.bf16.mxu0 0
      %1029 = vmatpush1.bf16.msra.mxu0 0
      %1030 = vmatprep.subr.bf16.mxu0 0
      %1031 = vmatpush1.bf16.msra.mxu0 0
      %1032 = vmatprep.subr.bf16.mxu0 0
      %1033 = vmatpush1.bf16.msra.mxu0 0
      %1034 = vmatprep.subr.bf16.mxu0 0
      %1035 = vmatpush1.bf16.msra.mxu0 0
      %1036 = vmatprep.mubr.bf16.mxu0 0
      %1037 = vmatmul.mubr.bf16.gmra.mrb[0].mxu0 %v988
      %v1038 = vpop.f32.mrb[0].mxu0
      %v1039 = vadd.f32 %v879, %v1038
      %v1040 = vpop.f32.mrb[0].mxu0
      %v1041 = vadd.f32 %v879, %v1040
      %v1042 = vpop.f32.mrb[0].mxu0
      %v1043 = vadd.f32 %v884, %v1042
      %v1044 = vpop.f32.mrb[0].mxu0
      %v1045 = vadd.f32 %v884, %v1044
      %1046 = vmatprep.mubr.bf16.mxu0 0
      %1047 = vmatmul.mubr.bf16.gmra.mrb[0].mxu0 %v989
      %v1048 = vpop.f32.mrb[0].mxu0
      %v1049 = vadd.f32 %v889, %v1048
      %v1050 = vpop.f32.mrb[0].mxu0
      %v1051 = vadd.f32 %v889, %v1050
      %v1052 = vpop.f32.mrb[0].mxu0
      %v1053 = vadd.f32 %v894, %v1052
      %v1054 = vpop.f32.mrb[0].mxu0
      %v1055 = vadd.f32 %v894, %v1054
      %1056 = vmatprep.mubr.bf16.mxu0 0
      %1057 = vmatmul.mubr.bf16.gmra.mrb[0].mxu0 %v990
      %v1058 = vpop.f32.mrb[0].mxu0
      %v1059 = vadd.f32 %v899, %v1058
      %v1060 = vpop.f32.mrb[0].mxu0
      %v1061 = vadd.f32 %v899, %v1060
      %v1062 = vpop.f32.mrb[0].mxu0
      %v1063 = vadd.f32 %v904, %v1062
      %v1064 = vpop.f32.mrb[0].mxu0
      %v1065 = vadd.f32 %v904, %v1064
      %1066 = vmatprep.mubr.bf16.mxu0 0
      %1067 = vmatmul.mubr.bf16.gmra.mrb[0].mxu0 %v991
      %v1068 = vpop.f32.mrb[0].mxu0
      %v1069 = vadd.f32 %v909, %v1068
      %v1070 = vpop.f32.mrb[0].mxu0
      %v1071 = vadd.f32 %v909, %v1070
      %v1072 = vpop.f32.mrb[0].mxu0
      %v1073 = vadd.f32 %v914, %v1072
      %v1074 = vpop.f32.mrb[0].mxu0
      %v1075 = vadd.f32 %v914, %v1074
      %1076 = vmatprep.mubr.bf16.mxu0 0
      %1077 = vmatmul.mubr.bf16.gmra.mrb[0].mxu0 %v992
      %v1078 = vpop.f32.mrb[0].mxu0
      %v1079 = vadd.f32 %v919, %v1078
      %v1080 = vpop.f32.mrb[0].mxu0
      %v1081 = vadd.f32 %v919, %v1080
      %v1082 = vpop.f32.mrb[0].mxu0
      %v1083 = vadd.f32 %v924, %v1082
      %v1084 = vpop.f32.mrb[0].mxu0
      %v1085 = vadd.f32 %v924, %v1084
      %1086 = vmatprep.mubr.bf16.mxu0 0
      %1087 = vmatmul.mubr.bf16.gmra.mrb[0].mxu0 %v993
      %v1088 = vpop.f32.mrb[0].mxu0
      %v1089 = vadd.f32 %v929, %v1088
      %v1090 = vpop.f32.mrb[0].mxu0
      %v1091 = vadd.f32 %v929, %v1090
      %v1092 = vpop.f32.mrb[0].mxu0
      %v1093 = vadd.f32 %v934, %v1092
      %v1094 = vpop.f32.mrb[0].mxu0
      %v1095 = vadd.f32 %v934, %v1094
      %1096 = vmatprep.mubr.bf16.mxu0 0
      %1097 = vmatmul.mubr.bf16.gmra.mrb[0].mxu0 %v994
      %v1098 = vpop.f32.mrb[0].mxu0
      %v1099 = vadd.f32 %v939, %v1098
      %v1100 = vpop.f32.mrb[0].mxu0
      %v1101 = vadd.f32 %v939, %v1100
      %v1102 = vpop.f32.mrb[0].mxu0
      %v1103 = vadd.f32 %v944, %v1102
      %v1104 = vpop.f32.mrb[0].mxu0
      %v1105 = vadd.f32 %v944, %v1104
      %1106 = vmatprep.mubr.bf16.mxu0 0
      %1107 = vmatmul.mubr.bf16.gmra.mrb[0].mxu0 %v995
      %v1108 = vpop.f32.mrb[0].mxu0
      %v1109 = vadd.f32 %v949, %v1108
      %v1110 = vpop.f32.mrb[0].mxu0
      %v1111 = vadd.f32 %v949, %v1110
      %v1112 = vpop.f32.mrb[0].mxu0
      %v1113 = vadd.f32 %v954, %v1112
      %v1114 = vpop.f32.mrb[0].mxu0
      %v1115 = vadd.f32 %v954, %v1114
      %1116 = vdwg.mxu0
      %v1117 = vld [vmem:[%s5] sm:$0xf]
      %v1118 = vld [vmem:[%s5 + $0x4] sm:$0xf]
      %v1119 = vld [vmem:[%s5 + $0x8] sm:$0xf]
      %v1120 = vld [vmem:[%s5 + $0xc] sm:$0xf]
      %v1121 = vld [vmem:[%s5 + $0x10] sm:$0xf]
      %v1122 = vld [vmem:[%s5 + $0x14] sm:$0xf]
      %v1123 = vld [vmem:[%s5 + $0x18] sm:$0xf]
      %v1124 = vld [vmem:[%s5 + $0x1c] sm:$0xf]
      %v1125 = vld [vmem:[%s5 + $0x20] sm:$0xf]
      %v1126 = vld [vmem:[%s5 + $0x24] sm:$0xf]
      %v1127 = vld [vmem:[%s5 + $0x28] sm:$0xf]
      %v1128 = vld [vmem:[%s5 + $0x2c] sm:$0xf]
      %v1129 = vld [vmem:[%s5 + $0x30] sm:$0xf]
      %v1130 = vld [vmem:[%s5 + $0x34] sm:$0xf]
      %v1131 = vld [vmem:[%s5 + $0x38] sm:$0xf]
      %v1132 = vld [vmem:[%s5 + $0x3c] sm:$0xf]
      %v1133 = vmul.f32 %v1039, 0.5
      %v1134 = vmul.f32 %v1041, 0.5
      %v1135 = vmul.f32 %v1043, 0.5
      %v1136 = vmul.f32 %v1045, 0.5
      %v1137 = vmul.f32 %v1049, 0.5
      %v1138 = vmul.f32 %v1051, 0.5
      %v1139 = vmul.f32 %v1053, 0.5
      %v1140 = vmul.f32 %v1055, 0.5
      %v1141 = vmul.f32 %v1059, 0.5
      %v1142 = vmul.f32 %v1061, 0.5
      %v1143 = vmul.f32 %v1063, 0.5
      %v1144 = vmul.f32 %v1065, 0.5
      %v1145 = vmul.f32 %v1069, 0.5
      %v1146 = vmul.f32 %v1071, 0.5
      %v1147 = vmul.f32 %v1073, 0.5
      %v1148 = vmul.f32 %v1075, 0.5
      %v1149 = vmul.f32 %v1079, 0.5
      %v1150 = vmul.f32 %v1081, 0.5
      %v1151 = vmul.f32 %v1083, 0.5
      %v1152 = vmul.f32 %v1085, 0.5
      %v1153 = vmul.f32 %v1089, 0.5
      %v1154 = vmul.f32 %v1091, 0.5
      %v1155 = vmul.f32 %v1093, 0.5
      %v1156 = vmul.f32 %v1095, 0.5
      %v1157 = vmul.f32 %v1099, 0.5
      %v1158 = vmul.f32 %v1101, 0.5
      %v1159 = vmul.f32 %v1103, 0.5
      %v1160 = vmul.f32 %v1105, 0.5
      %v1161 = vmul.f32 %v1109, 0.5
      %v1162 = vmul.f32 %v1111, 0.5
      %v1163 = vmul.f32 %v1113, 0.5
      %v1164 = vmul.f32 %v1115, 0.5
      %v1165 = vtanh.pop %v1133
      %v1166 = vtanh.pop %v1134
      %v1167 = vtanh.pop %v1135
      %v1168 = vtanh.pop %v1136
      %v1169 = vtanh.pop %v1137
      %v1170 = vtanh.pop %v1138
      %v1171 = vtanh.pop %v1139
      %v1172 = vtanh.pop %v1140
      %v1173 = vtanh.pop %v1141
      %v1174 = vtanh.pop %v1142
      %v1175 = vtanh.pop %v1143
      %v1176 = vtanh.pop %v1144
      %v1177 = vtanh.pop %v1145
      %v1178 = vtanh.pop %v1146
      %v1179 = vtanh.pop %v1147
      %v1180 = vtanh.pop %v1148
      %v1181 = vtanh.pop %v1149
      %v1182 = vtanh.pop %v1150
      %v1183 = vtanh.pop %v1151
      %v1184 = vtanh.pop %v1152
      %v1185 = vtanh.pop %v1153
      %v1186 = vtanh.pop %v1154
      %v1187 = vtanh.pop %v1155
      %v1188 = vtanh.pop %v1156
      %v1189 = vtanh.pop %v1157
      %v1190 = vtanh.pop %v1158
      %v1191 = vtanh.pop %v1159
      %v1192 = vtanh.pop %v1160
      %v1193 = vtanh.pop %v1161
      %v1194 = vtanh.pop %v1162
      %v1195 = vtanh.pop %v1163
      %v1196 = vtanh.pop %v1164
      %v1197 = vadd.f32 %v1165, 1.0
      %v1198 = vadd.f32 %v1166, 1.0
      %v1199 = vadd.f32 %v1167, 1.0
      %v1200 = vadd.f32 %v1168, 1.0
      %v1201 = vadd.f32 %v1169, 1.0
      %v1202 = vadd.f32 %v1170, 1.0
      %v1203 = vadd.f32 %v1171, 1.0
      %v1204 = vadd.f32 %v1172, 1.0
      %v1205 = vadd.f32 %v1173, 1.0
      %v1206 = vadd.f32 %v1174, 1.0
      %v1207 = vadd.f32 %v1175, 1.0
      %v1208 = vadd.f32 %v1176, 1.0
      %v1209 = vadd.f32 %v1177, 1.0
      %v1210 = vadd.f32 %v1178, 1.0
      %v1211 = vadd.f32 %v1179, 1.0
      %v1212 = vadd.f32 %v1180, 1.0
      %v1213 = vadd.f32 %v1181, 1.0
      %v1214 = vadd.f32 %v1182, 1.0
      %v1215 = vadd.f32 %v1183, 1.0
      %v1216 = vadd.f32 %v1184, 1.0
      %v1217 = vadd.f32 %v1185, 1.0
      %v1218 = vadd.f32 %v1186, 1.0
      %v1219 = vadd.f32 %v1187, 1.0
      %v1220 = vadd.f32 %v1188, 1.0
      %v1221 = vadd.f32 %v1189, 1.0
      %v1222 = vadd.f32 %v1190, 1.0
      %v1223 = vadd.f32 %v1191, 1.0
      %v1224 = vadd.f32 %v1192, 1.0
      %v1225 = vadd.f32 %v1193, 1.0
      %v1226 = vadd.f32 %v1194, 1.0
      %v1227 = vadd.f32 %v1195, 1.0
      %v1228 = vadd.f32 %v1196, 1.0
      %v1229 = vmul.f32 %v1133, %v1197
      %v1230 = vmul.f32 %v1134, %v1198
      %v1231 = vmul.f32 %v1135, %v1199
      %v1232 = vmul.f32 %v1136, %v1200
      %v1233 = vmul.f32 %v1137, %v1201
      %v1234 = vmul.f32 %v1138, %v1202
      %v1235 = vmul.f32 %v1139, %v1203
      %v1236 = vmul.f32 %v1140, %v1204
      %v1237 = vmul.f32 %v1141, %v1205
      %v1238 = vmul.f32 %v1142, %v1206
      %v1239 = vmul.f32 %v1143, %v1207
      %v1240 = vmul.f32 %v1144, %v1208
      %v1241 = vmul.f32 %v1145, %v1209
      %v1242 = vmul.f32 %v1146, %v1210
      %v1243 = vmul.f32 %v1147, %v1211
      %v1244 = vmul.f32 %v1148, %v1212
      %v1245 = vmul.f32 %v1149, %v1213
      %v1246 = vmul.f32 %v1150, %v1214
      %v1247 = vmul.f32 %v1151, %v1215
      %v1248 = vmul.f32 %v1152, %v1216
      %v1249 = vmul.f32 %v1153, %v1217
      %v1250 = vmul.f32 %v1154, %v1218
      %v1251 = vmul.f32 %v1155, %v1219
      %v1252 = vmul.f32 %v1156, %v1220
      %v1253 = vmul.f32 %v1157, %v1221
      %v1254 = vmul.f32 %v1158, %v1222
      %v1255 = vmul.f32 %v1159, %v1223
      %v1256 = vmul.f32 %v1160, %v1224
      %v1257 = vmul.f32 %v1161, %v1225
      %v1258 = vmul.f32 %v1162, %v1226
      %v1259 = vmul.f32 %v1163, %v1227
      %v1260 = vmul.f32 %v1164, %v1228
      %v1261 = vpack.c.bf16 %v1231, %v1229
      %v1262 = vpack.c.bf16 %v1232, %v1230
      %v1263 = vpack.c.bf16 %v1235, %v1233
      %v1264 = vpack.c.bf16 %v1236, %v1234
      %v1265 = vpack.c.bf16 %v1239, %v1237
      %v1266 = vpack.c.bf16 %v1240, %v1238
      %v1267 = vpack.c.bf16 %v1243, %v1241
      %v1268 = vpack.c.bf16 %v1244, %v1242
      %v1269 = vpack.c.bf16 %v1247, %v1245
      %v1270 = vpack.c.bf16 %v1248, %v1246
      %v1271 = vpack.c.bf16 %v1251, %v1249
      %v1272 = vpack.c.bf16 %v1252, %v1250
      %v1273 = vpack.c.bf16 %v1255, %v1253
      %v1274 = vpack.c.bf16 %v1256, %v1254
      %v1275 = vpack.c.bf16 %v1259, %v1257
      %v1276 = vpack.c.bf16 %v1260, %v1258
      %v1277 = vld [vmem:[%s6] sm:$0xff]
      %v1278 = vld [vmem:[%s6 + $0x8] sm:$0xff]
      %v1279 = vld [vmem:[%s6 + $0x10] sm:$0xff]
      %v1280 = vld [vmem:[%s6 + $0x18] sm:$0xff]
      %v1281 = vld [vmem:[%s6 + $0x20] sm:$0xff]
      %v1282 = vld [vmem:[%s6 + $0x28] sm:$0xff]
      %v1283 = vld [vmem:[%s6 + $0x30] sm:$0xff]
      %v1284 = vld [vmem:[%s6 + $0x38] sm:$0xff]
      %v1285 = vld [vmem:[%s6 + $0x40] sm:$0xff]
      %v1286 = vld [vmem:[%s6 + $0x48] sm:$0xff]
      %v1287 = vld [vmem:[%s6 + $0x50] sm:$0xff]
      %v1288 = vld [vmem:[%s6 + $0x58] sm:$0xff]
      %v1289 = vld [vmem:[%s6 + $0x60] sm:$0xff]
      %v1290 = vld [vmem:[%s6 + $0x68] sm:$0xff]
      %v1291 = vld [vmem:[%s6 + $0x70] sm:$0xff]
      %v1292 = vld [vmem:[%s6 + $0x78] sm:$0xff]
      %1294 = vset.pattern.permute.xlu0 0
      %1295 = vperm.xlu0 %1294, %v1277
      %v1296 = vpop.permute.xlu0 %1295
      %1299 = vset.pattern.permute.xlu0 0
      %1300 = vperm.xlu0 %1299, %v1278
      %v1301 = vpop.permute.xlu0 %1300
      %1304 = vset.pattern.permute.xlu0 0
      %1305 = vperm.xlu0 %1304, %v1279
      %v1306 = vpop.permute.xlu0 %1305
      %1309 = vset.pattern.permute.xlu0 0
      %1310 = vperm.xlu0 %1309, %v1280
      %v1311 = vpop.permute.xlu0 %1310
      %1314 = vset.pattern.permute.xlu0 0
      %1315 = vperm.xlu0 %1314, %v1281
      %v1316 = vpop.permute.xlu0 %1315
      %1319 = vset.pattern.permute.xlu0 0
      %1320 = vperm.xlu0 %1319, %v1282
      %v1321 = vpop.permute.xlu0 %1320
      %1324 = vset.pattern.permute.xlu0 0
      %1325 = vperm.xlu0 %1324, %v1283
      %v1326 = vpop.permute.xlu0 %1325
      %1329 = vset.pattern.permute.xlu0 0
      %1330 = vperm.xlu0 %1329, %v1284
      %v1331 = vpop.permute.xlu0 %1330
      %1334 = vset.pattern.permute.xlu0 0
      %1335 = vperm.xlu0 %1334, %v1285
      %v1336 = vpop.permute.xlu0 %1335
      %1339 = vset.pattern.permute.xlu0 0
      %1340 = vperm.xlu0 %1339, %v1286
      %v1341 = vpop.permute.xlu0 %1340
      %1344 = vset.pattern.permute.xlu0 0
      %1345 = vperm.xlu0 %1344, %v1287
      %v1346 = vpop.permute.xlu0 %1345
      %1349 = vset.pattern.permute.xlu0 0
      %1350 = vperm.xlu0 %1349, %v1288
      %v1351 = vpop.permute.xlu0 %1350
      %1354 = vset.pattern.permute.xlu0 0
      %1355 = vperm.xlu0 %1354, %v1289
      %v1356 = vpop.permute.xlu0 %1355
      %1359 = vset.pattern.permute.xlu0 0
      %1360 = vperm.xlu0 %1359, %v1290
      %v1361 = vpop.permute.xlu0 %1360
      %1364 = vset.pattern.permute.xlu0 0
      %1365 = vperm.xlu0 %1364, %v1291
      %v1366 = vpop.permute.xlu0 %1365
      %1369 = vset.pattern.permute.xlu0 0
      %1370 = vperm.xlu0 %1369, %v1292
      %v1371 = vpop.permute.xlu0 %1370
      %v1389 = vunpack.c.l.b16 %v1117
      %v1390 = vunpack.c.l.b16 %v1118
      %v1391 = vunpack.c.l.b16 %v1119
      %v1392 = vunpack.c.l.b16 %v1120
      %v1393 = vunpack.c.l.b16 %v1121
      %v1394 = vunpack.c.l.b16 %v1122
      %v1395 = vunpack.c.l.b16 %v1123
      %v1396 = vunpack.c.l.b16 %v1124
      %v1397 = vunpack.c.l.b16 %v1125
      %v1398 = vunpack.c.l.b16 %v1126
      %v1399 = vunpack.c.l.b16 %v1127
      %v1400 = vunpack.c.l.b16 %v1128
      %v1401 = vunpack.c.l.b16 %v1129
      %v1402 = vunpack.c.l.b16 %v1130
      %v1403 = vunpack.c.l.b16 %v1131
      %v1404 = vunpack.c.l.b16 %v1132
      %v1405 = vpack.c.b16 %v1390, %v1389
      %v1406 = vpack.c.b16 %v1392, %v1391
      %v1407 = vpack.c.b16 %v1394, %v1393
      %v1408 = vpack.c.b16 %v1396, %v1395
      %v1409 = vpack.c.b16 %v1398, %v1397
      %v1410 = vpack.c.b16 %v1400, %v1399
      %v1411 = vpack.c.b16 %v1402, %v1401
      %v1412 = vpack.c.b16 %v1404, %v1403
      %1421 = vmatprep.subr.bf16.mxu0 %v1262
      %1422 = vmatpush1.bf16.msra.mxu0 %v1261
      %1423 = vmatprep.subr.bf16.mxu0 %v1264
      %1424 = vmatpush1.bf16.msra.mxu0 %v1263
      %1425 = vmatprep.subr.bf16.mxu0 %v1266
      %1426 = vmatpush1.bf16.msra.mxu0 %v1265
      %1427 = vmatprep.subr.bf16.mxu0 %v1268
      %1428 = vmatpush1.bf16.msra.mxu0 %v1267
      %1429 = vmatprep.subr.bf16.mxu0 %v1270
      %1430 = vmatpush1.bf16.msra.mxu0 %v1269
      %1431 = vmatprep.subr.bf16.mxu0 %v1272
      %1432 = vmatpush1.bf16.msra.mxu0 %v1271
      %1433 = vmatprep.subr.bf16.mxu0 %v1274
      %1434 = vmatpush1.bf16.msra.mxu0 %v1273
      %1435 = vmatprep.subr.bf16.mxu0 %v1276
      %1436 = vmatpush1.bf16.msra.mxu0 %v1275
      %1437 = vmatprep.subr.bf16.mxu0 0
      %1438 = vmatpush1.bf16.msra.mxu0 0
      %1439 = vmatprep.subr.bf16.mxu0 0
      %1440 = vmatpush1.bf16.msra.mxu0 0
      %1441 = vmatprep.subr.bf16.mxu0 0
      %1442 = vmatpush1.bf16.msra.mxu0 0
      %1443 = vmatprep.subr.bf16.mxu0 0
      %1444 = vmatpush1.bf16.msra.mxu0 0
      %1445 = vmatprep.subr.bf16.mxu0 0
      %1446 = vmatpush1.bf16.msra.mxu0 0
      %1447 = vmatprep.subr.bf16.mxu0 0
      %1448 = vmatpush1.bf16.msra.mxu0 0
      %1449 = vmatprep.subr.bf16.mxu0 0
      %1450 = vmatpush1.bf16.msra.mxu0 0
      %1451 = vmatprep.subr.bf16.mxu0 0
      %1452 = vmatpush1.bf16.msra.mxu0 0
      %1453 = vmatprep.mubr.bf16.mxu0 0
      %1454 = vmatmul.mubr.bf16.gmra.mrb[0].mxu0 %v1405
      %v1455 = vpop.f32.mrb[0].mxu0
      %v1456 = vadd.f32 %v1296, %v1455
      %v1457 = vpop.f32.mrb[0].mxu0
      %v1458 = vadd.f32 %v1296, %v1457
      %v1459 = vpop.f32.mrb[0].mxu0
      %v1460 = vadd.f32 %v1301, %v1459
      %v1461 = vpop.f32.mrb[0].mxu0
      %v1462 = vadd.f32 %v1301, %v1461
      %1463 = vmatprep.mubr.bf16.mxu0 0
      %1464 = vmatmul.mubr.bf16.gmra.mrb[0].mxu0 %v1406
      %v1465 = vpop.f32.mrb[0].mxu0
      %v1466 = vadd.f32 %v1306, %v1465
      %v1467 = vpop.f32.mrb[0].mxu0
      %v1468 = vadd.f32 %v1306, %v1467
      %v1469 = vpop.f32.mrb[0].mxu0
      %v1470 = vadd.f32 %v1311, %v1469
      %v1471 = vpop.f32.mrb[0].mxu0
      %v1472 = vadd.f32 %v1311, %v1471
      %1473 = vmatprep.mubr.bf16.mxu0 0
      %1474 = vmatmul.mubr.bf16.gmra.mrb[0].mxu0 %v1407
      %v1475 = vpop.f32.mrb[0].mxu0
      %v1476 = vadd.f32 %v1316, %v1475
      %v1477 = vpop.f32.mrb[0].mxu0
      %v1478 = vadd.f32 %v1316, %v1477
      %v1479 = vpop.f32.mrb[0].mxu0
      %v1480 = vadd.f32 %v1321, %v1479
      %v1481 = vpop.f32.mrb[0].mxu0
      %v1482 = vadd.f32 %v1321, %v1481
      %1483 = vmatprep.mubr.bf16.mxu0 0
      %1484 = vmatmul.mubr.bf16.gmra.mrb[0].mxu0 %v1408
      %v1485 = vpop.f32.mrb[0].mxu0
      %v1486 = vadd.f32 %v1326, %v1485
      %v1487 = vpop.f32.mrb[0].mxu0
      %v1488 = vadd.f32 %v1326, %v1487
      %v1489 = vpop.f32.mrb[0].mxu0
      %v1490 = vadd.f32 %v1331, %v1489
      %v1491 = vpop.f32.mrb[0].mxu0
      %v1492 = vadd.f32 %v1331, %v1491
      %1493 = vmatprep.mubr.bf16.mxu0 0
      %1494 = vmatmul.mubr.bf16.gmra.mrb[0].mxu0 %v1409
      %v1495 = vpop.f32.mrb[0].mxu0
      %v1496 = vadd.f32 %v1336, %v1495
      %v1497 = vpop.f32.mrb[0].mxu0
      %v1498 = vadd.f32 %v1336, %v1497
      %v1499 = vpop.f32.mrb[0].mxu0
      %v1500 = vadd.f32 %v1341, %v1499
      %v1501 = vpop.f32.mrb[0].mxu0
      %v1502 = vadd.f32 %v1341, %v1501
      %1503 = vmatprep.mubr.bf16.mxu0 0
      %1504 = vmatmul.mubr.bf16.gmra.mrb[0].mxu0 %v1410
      %v1505 = vpop.f32.mrb[0].mxu0
      %v1506 = vadd.f32 %v1346, %v1505
      %v1507 = vpop.f32.mrb[0].mxu0
      %v1508 = vadd.f32 %v1346, %v1507
      %v1509 = vpop.f32.mrb[0].mxu0
      %v1510 = vadd.f32 %v1351, %v1509
      %v1511 = vpop.f32.mrb[0].mxu0
      %v1512 = vadd.f32 %v1351, %v1511
      %1513 = vmatprep.mubr.bf16.mxu0 0
      %1514 = vmatmul.mubr.bf16.gmra.mrb[0].mxu0 %v1411
      %v1515 = vpop.f32.mrb[0].mxu0
      %v1516 = vadd.f32 %v1356, %v1515
      %v1517 = vpop.f32.mrb[0].mxu0
      %v1518 = vadd.f32 %v1356, %v1517
      %v1519 = vpop.f32.mrb[0].mxu0
      %v1520 = vadd.f32 %v1361, %v1519
      %v1521 = vpop.f32.mrb[0].mxu0
      %v1522 = vadd.f32 %v1361, %v1521
      %1523 = vmatprep.mubr.bf16.mxu0 0
      %1524 = vmatmul.mubr.bf16.gmra.mrb[0].mxu0 %v1412
      %v1525 = vpop.f32.mrb[0].mxu0
      %v1526 = vadd.f32 %v1366, %v1525
      %v1527 = vpop.f32.mrb[0].mxu0
      %v1528 = vadd.f32 %v1366, %v1527
      %v1529 = vpop.f32.mrb[0].mxu0
      %v1530 = vadd.f32 %v1371, %v1529
      %v1531 = vpop.f32.mrb[0].mxu0
      %v1532 = vadd.f32 %v1371, %v1531
      %1533 = vdwg.mxu0
      %v1534 = vadd.f32 %v638, %v1456
      %v1535 = vadd.f32 %v640, %v1458
      %v1536 = vadd.f32 %v642, %v1460
      %v1537 = vadd.f32 %v644, %v1462
      %v1538 = vadd.f32 %v648, %v1466
      %v1539 = vadd.f32 %v650, %v1468
      %v1540 = vadd.f32 %v652, %v1470
      %v1541 = vadd.f32 %v654, %v1472
      %v1542 = vadd.f32 %v658, %v1476
      %v1543 = vadd.f32 %v660, %v1478
      %v1544 = vadd.f32 %v662, %v1480
      %v1545 = vadd.f32 %v664, %v1482
      %v1546 = vadd.f32 %v668, %v1486
      %v1547 = vadd.f32 %v670, %v1488
      %v1548 = vadd.f32 %v672, %v1490
      %v1549 = vadd.f32 %v674, %v1492
      %v1550 = vadd.f32 %v678, %v1496
      %v1551 = vadd.f32 %v680, %v1498
      %v1552 = vadd.f32 %v682, %v1500
      %v1553 = vadd.f32 %v684, %v1502
      %v1554 = vadd.f32 %v688, %v1506
      %v1555 = vadd.f32 %v690, %v1508
      %v1556 = vadd.f32 %v692, %v1510
      %v1557 = vadd.f32 %v694, %v1512
      %v1558 = vadd.f32 %v698, %v1516
      %v1559 = vadd.f32 %v700, %v1518
      %v1560 = vadd.f32 %v702, %v1520
      %v1561 = vadd.f32 %v704, %v1522
      %v1562 = vadd.f32 %v708, %v1526
      %v1563 = vadd.f32 %v710, %v1528
      %v1564 = vadd.f32 %v712, %v1530
      %v1565 = vadd.f32 %v714, %v1532
      %v1566 = vld [vmem:[%s7] sm:$0x3]
      %v1567 = vmul.f32 %v1534, 0.5
      %v1568 = vmul.f32 %v1535, 0.5
      %v1569 = vmul.f32 %v1536, 0.5
      %v1570 = vmul.f32 %v1537, 0.5
      %v1571 = vmul.f32 %v1538, 0.5
      %v1572 = vmul.f32 %v1539, 0.5
      %v1573 = vmul.f32 %v1540, 0.5
      %v1574 = vmul.f32 %v1541, 0.5
      %v1575 = vmul.f32 %v1542, 0.5
      %v1576 = vmul.f32 %v1543, 0.5
      %v1577 = vmul.f32 %v1544, 0.5
      %v1578 = vmul.f32 %v1545, 0.5
      %v1579 = vmul.f32 %v1546, 0.5
      %v1580 = vmul.f32 %v1547, 0.5
      %v1581 = vmul.f32 %v1548, 0.5
      %v1582 = vmul.f32 %v1549, 0.5
      %v1583 = vmul.f32 %v1550, 0.5
      %v1584 = vmul.f32 %v1551, 0.5
      %v1585 = vmul.f32 %v1552, 0.5
      %v1586 = vmul.f32 %v1553, 0.5
      %v1587 = vmul.f32 %v1554, 0.5
      %v1588 = vmul.f32 %v1555, 0.5
      %v1589 = vmul.f32 %v1556, 0.5
      %v1590 = vmul.f32 %v1557, 0.5
      %v1591 = vmul.f32 %v1558, 0.5
      %v1592 = vmul.f32 %v1559, 0.5
      %v1593 = vmul.f32 %v1560, 0.5
      %v1594 = vmul.f32 %v1561, 0.5
      %v1595 = vmul.f32 %v1562, 0.5
      %v1596 = vmul.f32 %v1563, 0.5
      %v1597 = vmul.f32 %v1564, 0.5
      %v1598 = vmul.f32 %v1565, 0.5
      %v1599 = vtanh.pop %v1567
      %v1600 = vtanh.pop %v1568
      %v1601 = vtanh.pop %v1569
      %v1602 = vtanh.pop %v1570
      %v1603 = vtanh.pop %v1571
      %v1604 = vtanh.pop %v1572
      %v1605 = vtanh.pop %v1573
      %v1606 = vtanh.pop %v1574
      %v1607 = vtanh.pop %v1575
      %v1608 = vtanh.pop %v1576
      %v1609 = vtanh.pop %v1577
      %v1610 = vtanh.pop %v1578
      %v1611 = vtanh.pop %v1579
      %v1612 = vtanh.pop %v1580
      %v1613 = vtanh.pop %v1581
      %v1614 = vtanh.pop %v1582
      %v1615 = vtanh.pop %v1583
      %v1616 = vtanh.pop %v1584
      %v1617 = vtanh.pop %v1585
      %v1618 = vtanh.pop %v1586
      %v1619 = vtanh.pop %v1587
      %v1620 = vtanh.pop %v1588
      %v1621 = vtanh.pop %v1589
      %v1622 = vtanh.pop %v1590
      %v1623 = vtanh.pop %v1591
      %v1624 = vtanh.pop %v1592
      %v1625 = vtanh.pop %v1593
      %v1626 = vtanh.pop %v1594
      %v1627 = vtanh.pop %v1595
      %v1628 = vtanh.pop %v1596
      %v1629 = vtanh.pop %v1597
      %v1630 = vtanh.pop %v1598
      %v1631 = vadd.f32 %v1599, 1.0
      %v1632 = vadd.f32 %v1600, 1.0
      %v1633 = vadd.f32 %v1601, 1.0
      %v1634 = vadd.f32 %v1602, 1.0
      %v1635 = vadd.f32 %v1603, 1.0
      %v1636 = vadd.f32 %v1604, 1.0
      %v1637 = vadd.f32 %v1605, 1.0
      %v1638 = vadd.f32 %v1606, 1.0
      %v1639 = vadd.f32 %v1607, 1.0
      %v1640 = vadd.f32 %v1608, 1.0
      %v1641 = vadd.f32 %v1609, 1.0
      %v1642 = vadd.f32 %v1610, 1.0
      %v1643 = vadd.f32 %v1611, 1.0
      %v1644 = vadd.f32 %v1612, 1.0
      %v1645 = vadd.f32 %v1613, 1.0
      %v1646 = vadd.f32 %v1614, 1.0
      %v1647 = vadd.f32 %v1615, 1.0
      %v1648 = vadd.f32 %v1616, 1.0
      %v1649 = vadd.f32 %v1617, 1.0
      %v1650 = vadd.f32 %v1618, 1.0
      %v1651 = vadd.f32 %v1619, 1.0
      %v1652 = vadd.f32 %v1620, 1.0
      %v1653 = vadd.f32 %v1621, 1.0
      %v1654 = vadd.f32 %v1622, 1.0
      %v1655 = vadd.f32 %v1623, 1.0
      %v1656 = vadd.f32 %v1624, 1.0
      %v1657 = vadd.f32 %v1625, 1.0
      %v1658 = vadd.f32 %v1626, 1.0
      %v1659 = vadd.f32 %v1627, 1.0
      %v1660 = vadd.f32 %v1628, 1.0
      %v1661 = vadd.f32 %v1629, 1.0
      %v1662 = vadd.f32 %v1630, 1.0
      %v1663 = vmul.f32 %v1567, %v1631
      %v1664 = vmul.f32 %v1568, %v1632
      %v1665 = vmul.f32 %v1569, %v1633
      %v1666 = vmul.f32 %v1570, %v1634
      %v1667 = vmul.f32 %v1571, %v1635
      %v1668 = vmul.f32 %v1572, %v1636
      %v1669 = vmul.f32 %v1573, %v1637
      %v1670 = vmul.f32 %v1574, %v1638
      %v1671 = vmul.f32 %v1575, %v1639
      %v1672 = vmul.f32 %v1576, %v1640
      %v1673 = vmul.f32 %v1577, %v1641
      %v1674 = vmul.f32 %v1578, %v1642
      %v1675 = vmul.f32 %v1579, %v1643
      %v1676 = vmul.f32 %v1580, %v1644
      %v1677 = vmul.f32 %v1581, %v1645
      %v1678 = vmul.f32 %v1582, %v1646
      %v1679 = vmul.f32 %v1583, %v1647
      %v1680 = vmul.f32 %v1584, %v1648
      %v1681 = vmul.f32 %v1585, %v1649
      %v1682 = vmul.f32 %v1586, %v1650
      %v1683 = vmul.f32 %v1587, %v1651
      %v1684 = vmul.f32 %v1588, %v1652
      %v1685 = vmul.f32 %v1589, %v1653
      %v1686 = vmul.f32 %v1590, %v1654
      %v1687 = vmul.f32 %v1591, %v1655
      %v1688 = vmul.f32 %v1592, %v1656
      %v1689 = vmul.f32 %v1593, %v1657
      %v1690 = vmul.f32 %v1594, %v1658
      %v1691 = vmul.f32 %v1595, %v1659
      %v1692 = vmul.f32 %v1596, %v1660
      %v1693 = vmul.f32 %v1597, %v1661
      %v1694 = vmul.f32 %v1598, %v1662
      %v1695 = vpack.c.bf16 %v1665, %v1663
      %v1696 = vpack.c.bf16 %v1666, %v1664
      %v1697 = vpack.c.bf16 %v1669, %v1667
      %v1698 = vpack.c.bf16 %v1670, %v1668
      %v1699 = vpack.c.bf16 %v1673, %v1671
      %v1700 = vpack.c.bf16 %v1674, %v1672
      %v1701 = vpack.c.bf16 %v1677, %v1675
      %v1702 = vpack.c.bf16 %v1678, %v1676
      %v1703 = vpack.c.bf16 %v1681, %v1679
      %v1704 = vpack.c.bf16 %v1682, %v1680
      %v1705 = vpack.c.bf16 %v1685, %v1683
      %v1706 = vpack.c.bf16 %v1686, %v1684
      %v1707 = vpack.c.bf16 %v1689, %v1687
      %v1708 = vpack.c.bf16 %v1690, %v1688
      %v1709 = vpack.c.bf16 %v1693, %v1691
      %v1710 = vpack.c.bf16 %v1694, %v1692
      %v1711 = vld [vmem:[%s8] sm:$0xf]
      %1713 = vset.pattern.permute.xlu0 0
      %1714 = vperm.xlu0 %1713, %v1711
      %v1715 = vpop.permute.xlu0 %1714
      %1717 = vmatprep.subr.bf16.mxu0 %v1696
      %1718 = vmatpush1.bf16.msra.mxu0 %v1695
      %1719 = vmatprep.subr.bf16.mxu0 %v1698
      %1720 = vmatpush1.bf16.msra.mxu0 %v1697
      %1721 = vmatprep.subr.bf16.mxu0 %v1700
      %1722 = vmatpush1.bf16.msra.mxu0 %v1699
      %1723 = vmatprep.subr.bf16.mxu0 %v1702
      %1724 = vmatpush1.bf16.msra.mxu0 %v1701
      %1725 = vmatprep.subr.bf16.mxu0 %v1704
      %1726 = vmatpush1.bf16.msra.mxu0 %v1703
      %1727 = vmatprep.subr.bf16.mxu0 %v1706
      %1728 = vmatpush1.bf16.msra.mxu0 %v1705
      %1729 = vmatprep.subr.bf16.mxu0 %v1708
      %1730 = vmatpush1.bf16.msra.mxu0 %v1707
      %1731 = vmatprep.subr.bf16.mxu0 %v1710
      %1732 = vmatpush1.bf16.msra.mxu0 %v1709
      %1733 = vmatprep.subr.bf16.mxu0 0
      %1734 = vmatpush1.bf16.msra.mxu0 0
      %1735 = vmatprep.subr.bf16.mxu0 0
      %1736 = vmatpush1.bf16.msra.mxu0 0
      %1737 = vmatprep.subr.bf16.mxu0 0
      %1738 = vmatpush1.bf16.msra.mxu0 0
      %1739 = vmatprep.subr.bf16.mxu0 0
      %1740 = vmatpush1.bf16.msra.mxu0 0
      %1741 = vmatprep.subr.bf16.mxu0 0
      %1742 = vmatpush1.bf16.msra.mxu0 0
      %1743 = vmatprep.subr.bf16.mxu0 0
      %1744 = vmatpush1.bf16.msra.mxu0 0
      %1745 = vmatprep.subr.bf16.mxu0 0
      %1746 = vmatpush1.bf16.msra.mxu0 0
      %1747 = vmatprep.subr.bf16.mxu0 0
      %1748 = vmatpush1.bf16.msra.mxu0 0
      %1749 = vmatprep.mubr.bf16.mxu0 0
      %1750 = vmatmul.mubr.bf16.gmra.mrb[0].mxu0 %v1566
      %v1751 = vpop.f32.mrb[0].mxu0
      %v1752 = vadd.f32 %v1715, %v1751
      %v1753 = vpop.f32.mrb[0].mxu0
      %v1754 = vadd.f32 %v1715, %v1753
      %v1755 = vpop.f32.mrb[0].mxu0
      %v1756 = vpop.f32.mrb[0].mxu0
      %1757 = vdwg.mxu0
      %v1760 = vcombine.low %v1752, %v1754
      %1762 = vst [vmem:[%s390] sm:$0xff] %v1760
      %s1763 = smul.u32 2, %s25
      %p1764 = scmp.lt.s32.totalorder %s24, 1
      %s1765 = scalar_select %p1764, %s24, 1
      %p1766 = scmp.lt.s32.totalorder %s1763, 1
      %s1767 = scalar_select %p1766, %s1763, 1
      %s1768 = smul.addr %s1765, 2
      %s1769 = sadd.s32 %s1767, %s1768
      %s1770 = smul.addr %s1769, 4
      %s1771 = scalar_lea.vmem %s9, %s1770
      // Predicated region
      $region57: #{net_forward.1} parent=55 // pred_check
        %p1772 = pneg %p253
      $region58: #{net_forward.1} parent=55 // pred_check_branch
        %1774 = sbr.rel (%p1772) target = $region60
      $region59: #{net_forward.1} parent=55 // pred_region
        %s1775 = smul.u32 2, %s25
      $region60: #{net_forward.1} parent=55 // pred_fallthru
        _
    $region56: #{net_forward.1} parent=5 // pred_fallthru
      _
    %p1776 = scmp.le.s32.totalorder 2, %s15
    // Predicated region
    $region61: #{net_forward.1} parent=5 // pred_check
      %p1777 = pneg %p1776
    $region62: #{net_forward.1} parent=5 // pred_check_branch
      %1779 = sbr.rel (%p1777) target = $region64
    $region63: #{net_forward.1} parent=5 // pred_region
      %s1780 = ssub.s32 %s15, 2
      // Predicated region
      $region65: #{net_forward.1} parent=63 // pred_check
        %p1781 = pneg %p259
      $region66: #{net_forward.1} parent=63 // pred_check_branch
        %1783 = sbr.rel (%p1781) target = $region68
      $region67: #{net_forward.1} parent=63 // pred_region
        %s1784 = smul.u32 2, %s27
        %p1785 = scmp.lt.s32.totalorder %s26, 1
        %s1786 = scalar_select %p1785, %s26, 1
        %p1787 = scmp.lt.s32.totalorder %s1784, 1
        %s1788 = scalar_select %p1787, %s1784, 1
        %s1789 = smul.addr %s1786, 2
        %s1790 = sadd.s32 %s1788, %s1789
        %s1791 = smul.addr %s1790, 4
        %s1792 = scalar_lea.vmem %s9, %s1791
      $region68: #{net_forward.1} parent=63 // pred_fallthru
        _
    $region64: #{net_forward.1} parent=5 // pred_fallthru
      _
  $region6: #{net_forward.1} parent=0 // loop_footer
    %s19 = sadd.s32 1, %s15
  $region7: #{net_forward.1} parent=0 // loop_footer_branch
    %14 = sbr.rel target = $region3
  $region8: #{net_forward.1} parent=0 // loop_exit
    _

</llo_original>
